<compile_context>
chip_gen: v5e
topology: v5e:2x2
jax: 0.10.0
libtpu: 0.0.40
codegen_flags: <defaults>
</compile_context>

<pallas_src>
import functools

import jax
import jax.numpy as jnp
from jax.experimental import pallas as pl
from jax.experimental.pallas import tpu as pltpu

# ---------------------------- configuration ---------------------------------
EMBEDDING_SIZE = 64
N_CLASS = 99
CN_PAD = 128           # class axis padded to a lane-dense 128
CONV_OUT = 32          # channels of the small conv stem
K_CENTERS = 2          # SoftTriple sub-centers per class (paper default 10)
LA = 20.0              # lambda scale
GAMMA_INV = 10.0       # 1 / gamma, gamma = 0.1
TAU = 0.2              # regularizer weight
MARGIN = 0.01          # margin delta

# Tiles here are tiny (<2 MiB); explicit limit keeps us honest on v7x (64 MiB
# physical / 32 MiB scoped default) as well as v5e/v6e.
_VMEM_LIMIT = 32 * 1024 * 1024


# ----------------------------- Pallas kernels --------------------------------
def fused_stem_kernel(x_ref, conv_w_ref, conv_b_ref, fc_w_ref, fc_b_ref,
                      emb_ref, *, H, W, C, conv_out):
    """Fused conv3x3(+ReLU) -> GAP -> fc -> L2-normalize for ONE image.

    x_ref:      (1, H+2, W+2, C)   zero-padded NHWC image
    conv_w_ref: (9, C, conv_out)   per-tap conv weights (dy-major, dx-minor)
    conv_b_ref: (1, conv_out)
    fc_w_ref:   (conv_out, E)
    fc_b_ref:   (1, E)
    emb_ref:    (1, 1, E)          L2-normalized embedding row
    """
    # 3x3 conv as 9 shifted matmuls accumulated in f32 (no im2col in HBM).
    acc = jnp.zeros((H * W, conv_out), jnp.float32)
    for dy in range(3):
        for dx in range(3):
            tap = x_ref[0, pl.ds(dy, H), pl.ds(dx, W), :]          # (H, W, C)
            tap2d = tap.reshape(H * W, C)
            w_t = conv_w_ref[dy * 3 + dx]                          # (C, conv_out)
            acc = acc + jnp.dot(tap2d, w_t,
                                preferred_element_type=jnp.float32)

    feat = jnp.maximum(acc + conv_b_ref[...], 0.0)                 # (H*W, conv_out)

    # Global average pool over all pixels of this image.
    pooled = jnp.sum(feat, axis=0, keepdims=True) * (1.0 / (H * W))  # (1, conv_out)

    # Linear head + L2 normalization.
    emb = jnp.dot(pooled, fc_w_ref[...],
                  preferred_element_type=jnp.float32) + fc_b_ref[...]
    inv_norm = jax.lax.rsqrt(jnp.sum(emb * emb, axis=-1, keepdims=True) + 1e-12)
    emb_ref[...] = (emb * inv_norm)[None]                          # (1, 1, E)


def softtriple_kernel(emb_ref, centers_ref, onehot_ref, loss_ref, *,
                      K, cn_pad, n_class, la, gamma_inv, tau, margin, inv_b):
    """SoftTriple loss on lane-dense (class-padded) operands.

    emb_ref:     (B, E)          L2-normalized embeddings
    centers_ref: (E, K*cn_pad)   sub-centers, K contiguous blocks of cn_pad
    onehot_ref:  (B, cn_pad)     one-hot labels (padded classes are zero)
    loss_ref:    (1, 1)
    """
    emb = emb_ref[...]
    c = centers_ref[...]
    onehot = onehot_ref[...]

    # Mask for the real classes (classes >= n_class are lane padding).
    lane = jax.lax.broadcasted_iota(jnp.int32, (1, cn_pad), 1)
    valid = lane < n_class                                        # (1, cn_pad)

    # L2-normalize every (k, class) sub-center over the embedding dim.
    inv_cn = jax.lax.rsqrt(jnp.sum(c * c, axis=0, keepdims=True) + 1e-12)
    cn = c * inv_cn                                               # (E, K*cn_pad)

    # One MXU call for all K sub-centers (instead of K tiny matmuls).
    sims_flat = jnp.dot(emb, cn, preferred_element_type=jnp.float32)  # (B, K*cn_pad)
    sims = [sims_flat[:, k * cn_pad:(k + 1) * cn_pad] for k in range(K)]

    # Softmax over the K sub-centers (temperature 1/gamma) -> relaxed simClass.
    m = sims[0]
    for k in range(1, K):
        m = jnp.maximum(m, sims[k])
    exps = [jnp.exp(gamma_inv * (s - m)) for s in sims]
    z = exps[0]
    for k in range(1, K):
        z = z + exps[k]
    inv_z = pl.reciprocal(z, approx=True)                         # EUP slot, frees VPU
    sim_class = exps[0] * inv_z * sims[0]
    for k in range(1, K):
        sim_class = sim_class + exps[k] * inv_z * sims[k]         # (B, cn_pad)

    # Margin on the target class, scaled logits, mean cross entropy.
    logits = la * (sim_class - margin * onehot)
    logits = jnp.where(valid, logits, -1e30)                      # mask padded classes
    row_max = jnp.max(logits, axis=-1, keepdims=True)
    lse = row_max + jnp.log(jnp.sum(jnp.exp(logits - row_max),
                                    axis=-1, keepdims=True))
    tgt = jnp.sum(onehot * logits, axis=-1, keepdims=True)
    loss = jnp.sum(lse - tgt) * inv_b

    if K > 1 and tau > 0.0:
        # Within-class sub-center diversity regularizer.  Padded classes are
        # masked out; the sqrt argument is clamped at 0 (f32 normalization
        # error can push <c_j,c_k> slightly above 1 + 5e-6 -> NaN otherwise).
        reg = jnp.float32(0.0)
        for j in range(K):
            for k in range(j + 1, K):
                inner = jnp.sum(cn[:, j * cn_pad:(j + 1) * cn_pad] *
                                cn[:, k * cn_pad:(k + 1) * cn_pad],
                                axis=0, keepdims=True)            # (1, cn_pad)
                term = jnp.sqrt(jnp.maximum(2.0 + 1e-5 - 2.0 * inner, 0.0))
                reg = reg + jnp.sum(jnp.where(valid, term, 0.0))
        loss = loss + tau * (reg / (n_class * K * (K - 1)))

    loss_ref[...] = jnp.zeros((1, 1), jnp.float32) + loss


# ----------------------------- pallas_call wrappers ---------------------------
def fused_stem(x_pad, conv_w, conv_b, fc_w, fc_b):
    """Batch-parallel fused stem: one grid step per image."""
    B, Hp, Wp, C = x_pad.shape
    H, W = Hp - 2, Wp - 2
    conv_out = conv_w.shape[-1]
    E = fc_w.shape[-1]
    # TODO(synk): for BN-Inception-scale inputs, stream halo'd row tiles of the
    # image (manual DMA / Element blocks) instead of one whole-image block.
    kernel = functools.partial(fused_stem_kernel, H=H, W=W, C=C,
                               conv_out=conv_out)
    emb = pl.pallas_call(
        kernel,
        out_shape=jax.ShapeDtypeStruct((B, 1, E), jnp.float32),
        grid=(B,),
        in_specs=[
            pl.BlockSpec((1, Hp, Wp, C), lambda b: (b, 0, 0, 0)),
            pl.BlockSpec((9, C, conv_out), lambda b: (0, 0, 0)),
            pl.BlockSpec((1, conv_out), lambda b: (0, 0)),
            pl.BlockSpec((conv_out, E), lambda b: (0, 0)),
            pl.BlockSpec((1, E), lambda b: (0, 0)),
        ],
        out_specs=pl.BlockSpec((1, 1, E), lambda b: (b, 0, 0)),
        compiler_params=pltpu.CompilerParams(
            dimension_semantics=("parallel",),      # v7x: shard batch over TCs
            vmem_limit_bytes=_VMEM_LIMIT,
        ),
    )(x_pad, conv_w, conv_b, fc_w, fc_b)
    return emb.reshape(B, E)


def softtriple_loss(emb, centers2d, onehot, n_class):
    B, E = emb.shape
    kcn = centers2d.shape[1]
    K = kcn // CN_PAD
    kernel = functools.partial(
        softtriple_kernel, K=K, cn_pad=CN_PAD, n_class=n_class,
        la=LA, gamma_inv=GAMMA_INV, tau=TAU, margin=MARGIN, inv_b=1.0 / B)
    loss = pl.pallas_call(
        kernel,
        out_shape=jax.ShapeDtypeStruct((1, 1), jnp.float32),
        grid=(1,),
        in_specs=[pl.BlockSpec((B, E), lambda i: (0, 0)),
                  pl.BlockSpec((E, kcn), lambda i: (0, 0)),
                  pl.BlockSpec((B, CN_PAD), lambda i: (0, 0))],
        out_specs=pl.BlockSpec((1, 1), lambda i: (0, 0)),
        compiler_params=pltpu.CompilerParams(
            dimension_semantics=("arbitrary",),
            vmem_limit_bytes=_VMEM_LIMIT,
        ),
    )(emb, centers2d, onehot)
    return loss[0, 0]


# ----------------------------- model forward ---------------------------------
def init_params(key, c_in):
    k1, k2, k3 = jax.random.split(key, 3)
    return {
        # per-tap conv weights: (9, Cin, CONV_OUT), tap order dy-major/dx-minor
        "conv_w": 0.1 * jax.random.normal(k1, (9, c_in, CONV_OUT), jnp.float32),
        "conv_b": jnp.zeros((1, CONV_OUT), jnp.float32),
        "fc_w": 0.1 * jax.random.normal(k2, (CONV_OUT, EMBEDDING_SIZE), jnp.float32),
        "fc_b": jnp.zeros((1, EMBEDDING_SIZE), jnp.float32),
        # K sub-centers per class: (K, embedding_size, n_class)
        "centers": jax.random.normal(k3, (K_CENTERS, EMBEDDING_SIZE, N_CLASS),
                                     jnp.float32),
    }


@functools.partial(jax.jit, static_argnames=("use_loss",))
def softtriple_net_forward(params, x_nchw, labels, use_loss=True):
    x = jnp.transpose(x_nchw, (0, 2, 3, 1))                 # NCHW -> NHWC
    # 3x3 / stride 1 / pad 1 halo: ~1.27x HBM instead of the 9x im2col blow-up.
    xp = jnp.pad(x, ((0, 0), (1, 1), (1, 1), (0, 0)))

    embedding = fused_stem(xp, params["conv_w"], params["conv_b"],
                           params["fc_w"], params["fc_b"])  # (B, E)

    if use_loss:
        # Lane-dense loss operands: pad classes 99 -> 128 and flatten K into lanes.
        K, E, n_class = params["centers"].shape
        cpad = jnp.pad(params["centers"],
                       ((0, 0), (0, 0), (0, CN_PAD - n_class)))   # (K, E, 128)
        centers2d = jnp.transpose(cpad, (1, 0, 2)).reshape(E, K * CN_PAD)
        onehot = jax.nn.one_hot(labels, CN_PAD, dtype=jnp.float32)  # padded cols zero
        loss = softtriple_loss(embedding, centers2d, onehot, n_class)
        return loss, embedding
    return embedding


# ----------------------------- main -------------------------------------------
if __name__ == "__main__":
    key = jax.random.PRNGKey(0)
    kx, kl, kp = jax.random.split(key, 3)

    x = jax.random.normal(kx, (2, 4, 16, 16), jnp.float32)  # NCHW like PyTorch
    labels = jax.random.randint(kl, (2,), 0, N_CLASS, jnp.int32)
    params = init_params(kp, c_in=4)

    loss, embedding = softtriple_net_forward(params, x, labels, use_loss=True)
    jax.block_until_ready((loss, embedding))

    assert embedding.shape == (2, EMBEDDING_SIZE)
    assert bool(jnp.isfinite(loss))
    print("KERNEL_OK")
</pallas_src>

<mosaic_0001>
module attributes {stable_mosaic.version = 11 : i64} {
  func.func @fused_stem_kernel(%arg0: i32, %arg1: memref<1x18x18x4xf32, #tpu.memory_space<vmem>>, %arg2: memref<9x4x32xf32, #tpu.memory_space<vmem>>, %arg3: memref<1x32xf32, #tpu.memory_space<vmem>>, %arg4: memref<32x64xf32, #tpu.memory_space<vmem>>, %arg5: memref<1x64xf32, #tpu.memory_space<vmem>>, %arg6: memref<1x1x64xf32, #tpu.memory_space<vmem>>) attributes {dimension_semantics = [#tpu.dimension_semantics<parallel>], iteration_bounds = array<i64: 2>, scalar_prefetch = 0 : i64, scratch_operands = 0 : i64, tpu.core_type = #tpu.core_type<tc>, window_params = [{transform_indices = @transform_0, window_bounds = array<i64: 1, 18, 18, 4>}, {pipeline_mode = #tpu.pipeline_mode<synchronous>, transform_indices = @transform_1, window_bounds = array<i64: 9, 4, 32>}, {pipeline_mode = #tpu.pipeline_mode<synchronous>, transform_indices = @transform_2, window_bounds = array<i64: 1, 32>}, {pipeline_mode = #tpu.pipeline_mode<synchronous>, transform_indices = @transform_3, window_bounds = array<i64: 32, 64>}, {pipeline_mode = #tpu.pipeline_mode<synchronous>, transform_indices = @transform_4, window_bounds = array<i64: 1, 64>}, {transform_indices = @transform_5, window_bounds = array<i64: 1, 1, 64>}]} {
    %cst = arith.constant 0.000000e+00 : f32
    %0 = vector.broadcast %cst : f32 to vector<256x32xf32>
    %c0 = arith.constant 0 : index
    %c0_0 = arith.constant 0 : index
    %c0_1 = arith.constant 0 : index
    %c0_2 = arith.constant 0 : index
    %1 = vector.load %arg1[%c0, %c0_0, %c0_1, %c0_2] : memref<1x18x18x4xf32, #tpu.memory_space<vmem>>, vector<1x16x16x4xf32>
    %2 = vector.shape_cast %1 : vector<1x16x16x4xf32> to vector<16x16x4xf32>
    %3 = vector.shape_cast %2 : vector<16x16x4xf32> to vector<256x4xf32>
    %c0_3 = arith.constant 0 : index
    %c0_4 = arith.constant 0 : index
    %c0_5 = arith.constant 0 : index
    %4 = vector.load %arg2[%c0_3, %c0_4, %c0_5] : memref<9x4x32xf32, #tpu.memory_space<vmem>>, vector<1x4x32xf32>
    %5 = vector.shape_cast %4 : vector<1x4x32xf32> to vector<4x32xf32>
    %cst_6 = arith.constant dense<0.000000e+00> : vector<256x32xf32>
    %6 = tpu.matmul %3, %5, %cst_6 {dimension_numbers = #tpu.dot_dimension_numbers<[1], [0], [0], [1], [0, 0, 1, 1], [], []>} : vector<256x4xf32>, vector<4x32xf32>, vector<256x32xf32> -> vector<256x32xf32>
    %7 = arith.addf %0, %6 : vector<256x32xf32>
    %c0_7 = arith.constant 0 : index
    %c0_8 = arith.constant 0 : index
    %c1 = arith.constant 1 : index
    %c0_9 = arith.constant 0 : index
    %8 = vector.load %arg1[%c0_7, %c0_8, %c1, %c0_9] : memref<1x18x18x4xf32, #tpu.memory_space<vmem>>, vector<1x16x16x4xf32>
    %9 = vector.shape_cast %8 : vector<1x16x16x4xf32> to vector<16x16x4xf32>
    %10 = vector.shape_cast %9 : vector<16x16x4xf32> to vector<256x4xf32>
    %c1_10 = arith.constant 1 : index
    %c0_11 = arith.constant 0 : index
    %c0_12 = arith.constant 0 : index
    %11 = vector.load %arg2[%c1_10, %c0_11, %c0_12] : memref<9x4x32xf32, #tpu.memory_space<vmem>>, vector<1x4x32xf32>
    %12 = vector.shape_cast %11 : vector<1x4x32xf32> to vector<4x32xf32>
    %cst_13 = arith.constant dense<0.000000e+00> : vector<256x32xf32>
    %13 = tpu.matmul %10, %12, %cst_13 {dimension_numbers = #tpu.dot_dimension_numbers<[1], [0], [0], [1], [0, 0, 1, 1], [], []>} : vector<256x4xf32>, vector<4x32xf32>, vector<256x32xf32> -> vector<256x32xf32>
    %14 = arith.addf %7, %13 : vector<256x32xf32>
    %c0_14 = arith.constant 0 : index
    %c0_15 = arith.constant 0 : index
    %c2 = arith.constant 2 : index
    %c0_16 = arith.constant 0 : index
    %15 = vector.load %arg1[%c0_14, %c0_15, %c2, %c0_16] : memref<1x18x18x4xf32, #tpu.memory_space<vmem>>, vector<1x16x16x4xf32>
    %16 = vector.shape_cast %15 : vector<1x16x16x4xf32> to vector<16x16x4xf32>
    %17 = vector.shape_cast %16 : vector<16x16x4xf32> to vector<256x4xf32>
    %c2_17 = arith.constant 2 : index
    %c0_18 = arith.constant 0 : index
    %c0_19 = arith.constant 0 : index
    %18 = vector.load %arg2[%c2_17, %c0_18, %c0_19] : memref<9x4x32xf32, #tpu.memory_space<vmem>>, vector<1x4x32xf32>
    %19 = vector.shape_cast %18 : vector<1x4x32xf32> to vector<4x32xf32>
    %cst_20 = arith.constant dense<0.000000e+00> : vector<256x32xf32>
    %20 = tpu.matmul %17, %19, %cst_20 {dimension_numbers = #tpu.dot_dimension_numbers<[1], [0], [0], [1], [0, 0, 1, 1], [], []>} : vector<256x4xf32>, vector<4x32xf32>, vector<256x32xf32> -> vector<256x32xf32>
    %21 = arith.addf %14, %20 : vector<256x32xf32>
    %c0_21 = arith.constant 0 : index
    %c1_22 = arith.constant 1 : index
    %c0_23 = arith.constant 0 : index
    %c0_24 = arith.constant 0 : index
    %22 = vector.load %arg1[%c0_21, %c1_22, %c0_23, %c0_24] : memref<1x18x18x4xf32, #tpu.memory_space<vmem>>, vector<1x16x16x4xf32>
    %23 = vector.shape_cast %22 : vector<1x16x16x4xf32> to vector<16x16x4xf32>
    %24 = vector.shape_cast %23 : vector<16x16x4xf32> to vector<256x4xf32>
    %c3 = arith.constant 3 : index
    %c0_25 = arith.constant 0 : index
    %c0_26 = arith.constant 0 : index
    %25 = vector.load %arg2[%c3, %c0_25, %c0_26] : memref<9x4x32xf32, #tpu.memory_space<vmem>>, vector<1x4x32xf32>
    %26 = vector.shape_cast %25 : vector<1x4x32xf32> to vector<4x32xf32>
    %cst_27 = arith.constant dense<0.000000e+00> : vector<256x32xf32>
    %27 = tpu.matmul %24, %26, %cst_27 {dimension_numbers = #tpu.dot_dimension_numbers<[1], [0], [0], [1], [0, 0, 1, 1], [], []>} : vector<256x4xf32>, vector<4x32xf32>, vector<256x32xf32> -> vector<256x32xf32>
    %28 = arith.addf %21, %27 : vector<256x32xf32>
    %c0_28 = arith.constant 0 : index
    %c1_29 = arith.constant 1 : index
    %c1_30 = arith.constant 1 : index
    %c0_31 = arith.constant 0 : index
    %29 = vector.load %arg1[%c0_28, %c1_29, %c1_30, %c0_31] : memref<1x18x18x4xf32, #tpu.memory_space<vmem>>, vector<1x16x16x4xf32>
    %30 = vector.shape_cast %29 : vector<1x16x16x4xf32> to vector<16x16x4xf32>
    %31 = vector.shape_cast %30 : vector<16x16x4xf32> to vector<256x4xf32>
    %c4 = arith.constant 4 : index
    %c0_32 = arith.constant 0 : index
    %c0_33 = arith.constant 0 : index
    %32 = vector.load %arg2[%c4, %c0_32, %c0_33] : memref<9x4x32xf32, #tpu.memory_space<vmem>>, vector<1x4x32xf32>
    %33 = vector.shape_cast %32 : vector<1x4x32xf32> to vector<4x32xf32>
    %cst_34 = arith.constant dense<0.000000e+00> : vector<256x32xf32>
    %34 = tpu.matmul %31, %33, %cst_34 {dimension_numbers = #tpu.dot_dimension_numbers<[1], [0], [0], [1], [0, 0, 1, 1], [], []>} : vector<256x4xf32>, vector<4x32xf32>, vector<256x32xf32> -> vector<256x32xf32>
    %35 = arith.addf %28, %34 : vector<256x32xf32>
    %c0_35 = arith.constant 0 : index
    %c1_36 = arith.constant 1 : index
    %c2_37 = arith.constant 2 : index
    %c0_38 = arith.constant 0 : index
    %36 = vector.load %arg1[%c0_35, %c1_36, %c2_37, %c0_38] : memref<1x18x18x4xf32, #tpu.memory_space<vmem>>, vector<1x16x16x4xf32>
    %37 = vector.shape_cast %36 : vector<1x16x16x4xf32> to vector<16x16x4xf32>
    %38 = vector.shape_cast %37 : vector<16x16x4xf32> to vector<256x4xf32>
    %c5 = arith.constant 5 : index
    %c0_39 = arith.constant 0 : index
    %c0_40 = arith.constant 0 : index
    %39 = vector.load %arg2[%c5, %c0_39, %c0_40] : memref<9x4x32xf32, #tpu.memory_space<vmem>>, vector<1x4x32xf32>
    %40 = vector.shape_cast %39 : vector<1x4x32xf32> to vector<4x32xf32>
    %cst_41 = arith.constant dense<0.000000e+00> : vector<256x32xf32>
    %41 = tpu.matmul %38, %40, %cst_41 {dimension_numbers = #tpu.dot_dimension_numbers<[1], [0], [0], [1], [0, 0, 1, 1], [], []>} : vector<256x4xf32>, vector<4x32xf32>, vector<256x32xf32> -> vector<256x32xf32>
    %42 = arith.addf %35, %41 : vector<256x32xf32>
    %c0_42 = arith.constant 0 : index
    %c2_43 = arith.constant 2 : index
    %c0_44 = arith.constant 0 : index
    %c0_45 = arith.constant 0 : index
    %43 = vector.load %arg1[%c0_42, %c2_43, %c0_44, %c0_45] : memref<1x18x18x4xf32, #tpu.memory_space<vmem>>, vector<1x16x16x4xf32>
    %44 = vector.shape_cast %43 : vector<1x16x16x4xf32> to vector<16x16x4xf32>
    %45 = vector.shape_cast %44 : vector<16x16x4xf32> to vector<256x4xf32>
    %c6 = arith.constant 6 : index
    %c0_46 = arith.constant 0 : index
    %c0_47 = arith.constant 0 : index
    %46 = vector.load %arg2[%c6, %c0_46, %c0_47] : memref<9x4x32xf32, #tpu.memory_space<vmem>>, vector<1x4x32xf32>
    %47 = vector.shape_cast %46 : vector<1x4x32xf32> to vector<4x32xf32>
    %cst_48 = arith.constant dense<0.000000e+00> : vector<256x32xf32>
    %48 = tpu.matmul %45, %47, %cst_48 {dimension_numbers = #tpu.dot_dimension_numbers<[1], [0], [0], [1], [0, 0, 1, 1], [], []>} : vector<256x4xf32>, vector<4x32xf32>, vector<256x32xf32> -> vector<256x32xf32>
    %49 = arith.addf %42, %48 : vector<256x32xf32>
    %c0_49 = arith.constant 0 : index
    %c2_50 = arith.constant 2 : index
    %c1_51 = arith.constant 1 : index
    %c0_52 = arith.constant 0 : index
    %50 = vector.load %arg1[%c0_49, %c2_50, %c1_51, %c0_52] : memref<1x18x18x4xf32, #tpu.memory_space<vmem>>, vector<1x16x16x4xf32>
    %51 = vector.shape_cast %50 : vector<1x16x16x4xf32> to vector<16x16x4xf32>
    %52 = vector.shape_cast %51 : vector<16x16x4xf32> to vector<256x4xf32>
    %c7 = arith.constant 7 : index
    %c0_53 = arith.constant 0 : index
    %c0_54 = arith.constant 0 : index
    %53 = vector.load %arg2[%c7, %c0_53, %c0_54] : memref<9x4x32xf32, #tpu.memory_space<vmem>>, vector<1x4x32xf32>
    %54 = vector.shape_cast %53 : vector<1x4x32xf32> to vector<4x32xf32>
    %cst_55 = arith.constant dense<0.000000e+00> : vector<256x32xf32>
    %55 = tpu.matmul %52, %54, %cst_55 {dimension_numbers = #tpu.dot_dimension_numbers<[1], [0], [0], [1], [0, 0, 1, 1], [], []>} : vector<256x4xf32>, vector<4x32xf32>, vector<256x32xf32> -> vector<256x32xf32>
    %56 = arith.addf %49, %55 : vector<256x32xf32>
    %c0_56 = arith.constant 0 : index
    %c2_57 = arith.constant 2 : index
    %c2_58 = arith.constant 2 : index
    %c0_59 = arith.constant 0 : index
    %57 = vector.load %arg1[%c0_56, %c2_57, %c2_58, %c0_59] : memref<1x18x18x4xf32, #tpu.memory_space<vmem>>, vector<1x16x16x4xf32>
    %58 = vector.shape_cast %57 : vector<1x16x16x4xf32> to vector<16x16x4xf32>
    %59 = vector.shape_cast %58 : vector<16x16x4xf32> to vector<256x4xf32>
    %c8 = arith.constant 8 : index
    %c0_60 = arith.constant 0 : index
    %c0_61 = arith.constant 0 : index
    %60 = vector.load %arg2[%c8, %c0_60, %c0_61] : memref<9x4x32xf32, #tpu.memory_space<vmem>>, vector<1x4x32xf32>
    %61 = vector.shape_cast %60 : vector<1x4x32xf32> to vector<4x32xf32>
    %cst_62 = arith.constant dense<0.000000e+00> : vector<256x32xf32>
    %62 = tpu.matmul %59, %61, %cst_62 {dimension_numbers = #tpu.dot_dimension_numbers<[1], [0], [0], [1], [0, 0, 1, 1], [], []>} : vector<256x4xf32>, vector<4x32xf32>, vector<256x32xf32> -> vector<256x32xf32>
    %63 = arith.addf %56, %62 : vector<256x32xf32>
    %c0_63 = arith.constant 0 : index
    %c0_64 = arith.constant 0 : index
    %64 = vector.load %arg3[%c0_63, %c0_64] : memref<1x32xf32, #tpu.memory_space<vmem>>, vector<1x32xf32>
    %65 = vector.broadcast %64 : vector<1x32xf32> to vector<256x32xf32>
    %66 = arith.addf %63, %65 : vector<256x32xf32>
    %cst_65 = arith.constant 0.000000e+00 : f32
    %67 = vector.broadcast %cst_65 : f32 to vector<256x32xf32>
    %68 = arith.maximumf %66, %67 : vector<256x32xf32>
    %cst_66 = arith.constant dense<0.000000e+00> : vector<32xf32>
    %69 = vector.multi_reduction <add>, %68, %cst_66 [0] : vector<256x32xf32> to vector<32xf32>
    %70 = vector.shape_cast %69 : vector<32xf32> to vector<1x32xf32>
    %cst_67 = arith.constant 3.906250e-03 : f32
    %71 = vector.broadcast %cst_67 : f32 to vector<1x32xf32>
    %72 = arith.mulf %70, %71 : vector<1x32xf32>
    %c0_68 = arith.constant 0 : index
    %c0_69 = arith.constant 0 : index
    %73 = vector.load %arg4[%c0_68, %c0_69] : memref<32x64xf32, #tpu.memory_space<vmem>>, vector<32x64xf32>
    %cst_70 = arith.constant dense<0.000000e+00> : vector<1x64xf32>
    %74 = tpu.matmul %72, %73, %cst_70 {dimension_numbers = #tpu.dot_dimension_numbers<[1], [0], [0], [1], [0, 0, 1, 1], [], []>} : vector<1x32xf32>, vector<32x64xf32>, vector<1x64xf32> -> vector<1x64xf32>
    %c0_71 = arith.constant 0 : index
    %c0_72 = arith.constant 0 : index
    %75 = vector.load %arg5[%c0_71, %c0_72] : memref<1x64xf32, #tpu.memory_space<vmem>>, vector<1x64xf32>
    %76 = arith.addf %74, %75 : vector<1x64xf32>
    %77 = arith.mulf %76, %76 : vector<1x64xf32>
    %cst_73 = arith.constant dense<0.000000e+00> : vector<1xf32>
    %78 = vector.multi_reduction <add>, %77, %cst_73 [1] : vector<1x64xf32> to vector<1xf32>
    %79 = vector.shape_cast %78 : vector<1xf32> to vector<1x1xf32>
    %cst_74 = arith.constant 9.99999996E-13 : f32
    %80 = vector.broadcast %cst_74 : f32 to vector<1x1xf32>
    %81 = arith.addf %79, %80 : vector<1x1xf32>
    %82 = math.rsqrt %81 : vector<1x1xf32>
    %83 = vector.broadcast %82 : vector<1x1xf32> to vector<1x64xf32>
    %84 = arith.mulf %76, %83 : vector<1x64xf32>
    %85 = vector.shape_cast %84 : vector<1x64xf32> to vector<1x1x64xf32>
    %c0_75 = arith.constant 0 : index
    %c0_76 = arith.constant 0 : index
    %c0_77 = arith.constant 0 : index
    %86 = vector.load %arg6[%c0_75, %c0_76, %c0_77] : memref<1x1x64xf32, #tpu.memory_space<vmem>>, vector<1x1x64xf32>
    tpu.vector_store %arg6[%c0_75, %c0_76, %c0_77], %85 {strides = array<i32>} : memref<1x1x64xf32, #tpu.memory_space<vmem>>, vector<1x1x64xf32>,
    return
  }
  func.func @transform_0(%arg0: i32) -> (i32, i32, i32, i32) {
    %c0_i32 = arith.constant 0 : i32
    %c0_i32_0 = arith.constant 0 : i32
    %c0_i32_1 = arith.constant 0 : i32
    %c0_i32_2 = arith.constant 0 : i32
    return %arg0, %c0_i32, %c0_i32_0, %c0_i32_1 : i32, i32, i32, i32
  }
  func.func @transform_1(%arg0: i32) -> (i32, i32, i32) {
    %c0_i32 = arith.constant 0 : i32
    %c0_i32_0 = arith.constant 0 : i32
    %c0_i32_1 = arith.constant 0 : i32
    %c0_i32_2 = arith.constant 0 : i32
    return %c0_i32, %c0_i32_0, %c0_i32_1 : i32, i32, i32
  }
  func.func @transform_2(%arg0: i32) -> (i32, i32) {
    %c0_i32 = arith.constant 0 : i32
    %c0_i32_0 = arith.constant 0 : i32
    %c0_i32_1 = arith.constant 0 : i32
    return %c0_i32, %c0_i32_0 : i32, i32
  }
  func.func @transform_3(%arg0: i32) -> (i32, i32) {
    %c0_i32 = arith.constant 0 : i32
    %c0_i32_0 = arith.constant 0 : i32
    %c0_i32_1 = arith.constant 0 : i32
    return %c0_i32, %c0_i32_0 : i32, i32
  }
  func.func @transform_4(%arg0: i32) -> (i32, i32) {
    %c0_i32 = arith.constant 0 : i32
    %c0_i32_0 = arith.constant 0 : i32
    %c0_i32_1 = arith.constant 0 : i32
    return %c0_i32, %c0_i32_0 : i32, i32
  }
  func.func @transform_5(%arg0: i32) -> (i32, i32, i32) {
    %c0_i32 = arith.constant 0 : i32
    %c0_i32_0 = arith.constant 0 : i32
    %c0_i32_1 = arith.constant 0 : i32
    return %arg0, %c0_i32, %c0_i32_0 : i32, i32, i32
  }
}

module attributes {stable_mosaic.version = 11 : i64} {
  func.func @softtriple_kernel(%arg0: i32, %arg1: memref<2x64xf32, #tpu.memory_space<vmem>>, %arg2: memref<64x256xf32, #tpu.memory_space<vmem>>, %arg3: memref<2x128xf32, #tpu.memory_space<vmem>>, %arg4: memref<1x1xf32, #tpu.memory_space<vmem>>) attributes {dimension_semantics = [#tpu.dimension_semantics<arbitrary>], iteration_bounds = array<i64: 1>, scalar_prefetch = 0 : i64, scratch_operands = 0 : i64, tpu.core_type = #tpu.core_type<tc>, window_params = [{pipeline_mode = #tpu.pipeline_mode<synchronous>, transform_indices = @transform_0, window_bounds = array<i64: 2, 64>}, {pipeline_mode = #tpu.pipeline_mode<synchronous>, transform_indices = @transform_1, window_bounds = array<i64: 64, 256>}, {pipeline_mode = #tpu.pipeline_mode<synchronous>, transform_indices = @transform_2, window_bounds = array<i64: 2, 128>}, {pipeline_mode = #tpu.pipeline_mode<synchronous>, transform_indices = @transform_3, window_bounds = array<i64: 1, 1>}]} {
    %c0 = arith.constant 0 : index
    %c0_0 = arith.constant 0 : index
    %0 = vector.load %arg1[%c0, %c0_0] : memref<2x64xf32, #tpu.memory_space<vmem>>, vector<2x64xf32>
    %c0_1 = arith.constant 0 : index
    %c0_2 = arith.constant 0 : index
    %1 = vector.load %arg2[%c0_1, %c0_2] : memref<64x256xf32, #tpu.memory_space<vmem>>, vector<64x256xf32>
    %c0_3 = arith.constant 0 : index
    %c0_4 = arith.constant 0 : index
    %2 = vector.load %arg3[%c0_3, %c0_4] : memref<2x128xf32, #tpu.memory_space<vmem>>, vector<2x128xf32>
    %3 = tpu.iota {dimensions = array<i32: 1>} : vector<1x128xi32>
    %c99_i32 = arith.constant 99 : i32
    %4 = vector.broadcast %c99_i32 : i32 to vector<1x128xi32>
    %5 = arith.cmpi slt, %3, %4 : vector<1x128xi32>
    %6 = arith.mulf %1, %1 : vector<64x256xf32>
    %cst = arith.constant dense<0.000000e+00> : vector<256xf32>
    %7 = vector.multi_reduction <add>, %6, %cst [0] : vector<64x256xf32> to vector<256xf32>
    %8 = vector.shape_cast %7 : vector<256xf32> to vector<1x256xf32>
    %cst_5 = arith.constant 9.99999996E-13 : f32
    %9 = vector.broadcast %cst_5 : f32 to vector<1x256xf32>
    %10 = arith.addf %8, %9 : vector<1x256xf32>
    %11 = math.rsqrt %10 : vector<1x256xf32>
    %12 = vector.broadcast %11 : vector<1x256xf32> to vector<64x256xf32>
    %13 = arith.mulf %1, %12 : vector<64x256xf32>
    %cst_6 = arith.constant dense<0.000000e+00> : vector<2x256xf32>
    %14 = tpu.matmul %0, %13, %cst_6 {dimension_numbers = #tpu.dot_dimension_numbers<[1], [0], [0], [1], [0, 0, 1, 1], [], []>} : vector<2x64xf32>, vector<64x256xf32>, vector<2x256xf32> -> vector<2x256xf32>
    %15 = vector.extract_strided_slice %14 {offsets = [0, 0], sizes = [2, 128], strides = [1, 1]} : vector<2x256xf32> to vector<2x128xf32>
    %16 = vector.extract_strided_slice %14 {offsets = [0, 128], sizes = [2, 128], strides = [1, 1]} : vector<2x256xf32> to vector<2x128xf32>
    %17 = arith.maximumf %15, %16 : vector<2x128xf32>
    %18 = arith.subf %15, %17 : vector<2x128xf32>
    %cst_7 = arith.constant 1.000000e+01 : f32
    %19 = vector.broadcast %cst_7 : f32 to vector<2x128xf32>
    %20 = arith.mulf %19, %18 : vector<2x128xf32>
    %21 = math.exp %20 : vector<2x128xf32>
    %22 = arith.subf %16, %17 : vector<2x128xf32>
    %cst_8 = arith.constant 1.000000e+01 : f32
    %23 = vector.broadcast %cst_8 : f32 to vector<2x128xf32>
    %24 = arith.mulf %23, %22 : vector<2x128xf32>
    %25 = math.exp %24 : vector<2x128xf32>
    %26 = arith.addf %21, %25 : vector<2x128xf32>
    %27 = tpu.reciprocal %26 {approx = true} : vector<2x128xf32> -> vector<2x128xf32>
    %28 = arith.mulf %21, %27 : vector<2x128xf32>
    %29 = arith.mulf %28, %15 : vector<2x128xf32>
    %30 = arith.mulf %25, %27 : vector<2x128xf32>
    %31 = arith.mulf %30, %16 : vector<2x128xf32>
    %32 = arith.addf %29, %31 : vector<2x128xf32>
    %cst_9 = arith.constant 0.00999999977 : f32
    %33 = vector.broadcast %cst_9 : f32 to vector<2x128xf32>
    %34 = arith.mulf %33, %2 : vector<2x128xf32>
    %35 = arith.subf %32, %34 : vector<2x128xf32>
    %cst_10 = arith.constant 2.000000e+01 : f32
    %36 = vector.broadcast %cst_10 : f32 to vector<2x128xf32>
    %37 = arith.mulf %36, %35 : vector<2x128xf32>
    %cst_11 = arith.constant -1.000000e+30 : f32
    %38 = vector.shape_cast %5 : vector<1x128xi1> to vector<1x128xi1>
    %39 = vector.broadcast %38 : vector<1x128xi1> to vector<2x128xi1>
    %40 = vector.broadcast %cst_11 : f32 to vector<2x128xf32>
    %41 = arith.select %39, %37, %40 : vector<2x128xi1>, vector<2x128xf32>
    %cst_12 = arith.constant dense<0xFF800000> : vector<2xf32>
    %42 = vector.multi_reduction <maximumf>, %41, %cst_12 [1] : vector<2x128xf32> to vector<2xf32>
    %43 = vector.shape_cast %42 : vector<2xf32> to vector<2x1xf32>
    %44 = vector.broadcast %43 : vector<2x1xf32> to vector<2x128xf32>
    %45 = arith.subf %41, %44 : vector<2x128xf32>
    %46 = math.exp %45 : vector<2x128xf32>
    %cst_13 = arith.constant dense<0.000000e+00> : vector<2xf32>
    %47 = vector.multi_reduction <add>, %46, %cst_13 [1] : vector<2x128xf32> to vector<2xf32>
    %48 = vector.shape_cast %47 : vector<2xf32> to vector<2x1xf32>
    %49 = math.log %48 : vector<2x1xf32>
    %50 = arith.addf %43, %49 : vector<2x1xf32>
    %51 = arith.mulf %2, %41 : vector<2x128xf32>
    %cst_14 = arith.constant dense<0.000000e+00> : vector<2xf32>
    %52 = vector.multi_reduction <add>, %51, %cst_14 [1] : vector<2x128xf32> to vector<2xf32>
    %53 = vector.shape_cast %52 : vector<2xf32> to vector<2x1xf32>
    %54 = arith.subf %50, %53 : vector<2x1xf32>
    %55 = vector.shape_cast %54 : vector<2x1xf32> to vector<1x2x1xf32>
    %cst_15 = arith.constant dense<0.000000e+00> : vector<1xf32>
    %56 = vector.multi_reduction <add>, %55, %cst_15 [1, 2] : vector<1x2x1xf32> to vector<1xf32>
    %57 = vector.shape_cast %56 : vector<1xf32> to vector<1x1x1xf32>
    %58 = vector.extract %57[0, 0, 0] : f32 from vector<1x1x1xf32>
    %cst_16 = arith.constant 5.000000e-01 : f32
    %59 = arith.mulf %58, %cst_16 : f32
    %60 = vector.extract_strided_slice %13 {offsets = [0, 0], sizes = [64, 128], strides = [1, 1]} : vector<64x256xf32> to vector<64x128xf32>
    %61 = vector.extract_strided_slice %13 {offsets = [0, 128], sizes = [64, 128], strides = [1, 1]} : vector<64x256xf32> to vector<64x128xf32>
    %62 = arith.mulf %60, %61 : vector<64x128xf32>
    %cst_17 = arith.constant dense<0.000000e+00> : vector<128xf32>
    %63 = vector.multi_reduction <add>, %62, %cst_17 [0] : vector<64x128xf32> to vector<128xf32>
    %64 = vector.shape_cast %63 : vector<128xf32> to vector<1x128xf32>
    %cst_18 = arith.constant 2.000000e+00 : f32
    %65 = vector.broadcast %cst_18 : f32 to vector<1x128xf32>
    %66 = arith.mulf %65, %64 : vector<1x128xf32>
    %cst_19 = arith.constant 2.000010e+00 : f32
    %67 = vector.broadcast %cst_19 : f32 to vector<1x128xf32>
    %68 = arith.subf %67, %66 : vector<1x128xf32>
    %cst_20 = arith.constant 0.000000e+00 : f32
    %69 = vector.broadcast %cst_20 : f32 to vector<1x128xf32>
    %70 = arith.maximumf %68, %69 : vector<1x128xf32>
    %71 = math.sqrt %70 : vector<1x128xf32>
    %cst_21 = arith.constant 0.000000e+00 : f32
    %72 = vector.broadcast %cst_21 : f32 to vector<1x128xf32>
    %73 = arith.select %5, %71, %72 : vector<1x128xi1>, vector<1x128xf32>
    %74 = vector.shape_cast %73 : vector<1x128xf32> to vector<1x1x128xf32>
    %cst_22 = arith.constant dense<0.000000e+00> : vector<1xf32>
    %75 = vector.multi_reduction <add>, %74, %cst_22 [1, 2] : vector<1x1x128xf32> to vector<1xf32>
    %76 = vector.shape_cast %75 : vector<1xf32> to vector<1x1x1xf32>
    %77 = vector.extract %76[0, 0, 0] : f32 from vector<1x1x1xf32>
    %cst_23 = arith.constant 0.000000e+00 : f32
    %78 = arith.addf %cst_23, %77 : f32
    %cst_24 = arith.constant 1.980000e+02 : f32
    %79 = arith.divf %78, %cst_24 : f32
    %cst_25 = arith.constant 2.000000e-01 : f32
    %80 = arith.mulf %cst_25, %79 : f32
    %81 = arith.addf %59, %80 : f32
    %cst_26 = arith.constant 0.000000e+00 : f32
    %82 = vector.broadcast %cst_26 : f32 to vector<1x1xf32>
    %83 = vector.broadcast %81 : f32 to vector<1x1xf32>
    %84 = arith.addf %82, %83 : vector<1x1xf32>
    %c0_27 = arith.constant 0 : index
    %c0_28 = arith.constant 0 : index
    %85 = vector.load %arg4[%c0_27, %c0_28] : memref<1x1xf32, #tpu.memory_space<vmem>>, vector<1x1xf32>
    tpu.vector_store %arg4[%c0_27, %c0_28], %84 {strides = array<i32>} : memref<1x1xf32, #tpu.memory_space<vmem>>, vector<1x1xf32>,
    return
  }
  func.func @transform_0(%arg0: i32) -> (i32, i32) {
    %c0_i32 = arith.constant 0 : i32
    %c0_i32_0 = arith.constant 0 : i32
    %c0_i32_1 = arith.constant 0 : i32
    return %c0_i32, %c0_i32_0 : i32, i32
  }
  func.func @transform_1(%arg0: i32) -> (i32, i32) {
    %c0_i32 = arith.constant 0 : i32
    %c0_i32_0 = arith.constant 0 : i32
    %c0_i32_1 = arith.constant 0 : i32
    return %c0_i32, %c0_i32_0 : i32, i32
  }
  func.func @transform_2(%arg0: i32) -> (i32, i32) {
    %c0_i32 = arith.constant 0 : i32
    %c0_i32_0 = arith.constant 0 : i32
    %c0_i32_1 = arith.constant 0 : i32
    return %c0_i32, %c0_i32_0 : i32, i32
  }
  func.func @transform_3(%arg0: i32) -> (i32, i32) {
    %c0_i32 = arith.constant 0 : i32
    %c0_i32_0 = arith.constant 0 : i32
    %c0_i32_1 = arith.constant 0 : i32
    return %c0_i32, %c0_i32_0 : i32, i32
  }
}

</mosaic_0001>

<llo_original>
// kernel: softtriple_net_forward.3
$region0: #{softtriple_net_forward.3}
  #allocation0 [shape = 'u32[]', space=smem, size = 0x4, offset = 0x4, fixed_abs, tag = 'smem constant byte address 0x4 - core index']
  #allocation1 [shape = 'u32[72,128]{1,0:T(1,128)}', space=vmem, size = 0x9000, scoped, tag = 'internal scratch']
  %s0 = inlined_call_operand.vmem [shape: f32[2,64], index: 0, kind: input, shape index: {}]
  %s1 = inlined_call_operand.vmem [shape: f32[64,256], index: 1, kind: input, shape index: {}]
  %s2 = inlined_call_operand.vmem [shape: f32[2,128], index: 2, kind: input, shape index: {}]
  %s3 = inlined_call_operand.hbm [shape: f32[1,1], index: 3, kind: output, shape index: {}]
  %s4 = sld [smem:[#allocation0]]
  $region22: #{softtriple_net_forward.3} parent=0
    _
  %s6 = ssub.s32 1, %s4
  %s7 = scalar_select 0, %s6, %s4
  $region1: #{softtriple_net_forward.3} parent=0
    #allocation2 [shape = 'u8[512]{0}', space=vmem, size = 0x400, scoped, tag = 'output window, operand 0, single buffered']
    #allocation3 [shape = 's32[1]{0}', space=sflag, size = 0x4, scoped, tag = 'scoped memory for softtriple_net_forward.3']
    %8 = vsyncpa [#allocation3], 0
    // Predicated region
    $region2: #{softtriple_net_forward.3} parent=1 // pred_check
      _
    $region3: #{softtriple_net_forward.3} parent=1 // pred_check_branch
      %10 = sbr.rel (0) target = $region5
    $region4: #{softtriple_net_forward.3} parent=1 // pred_region
      _
    $region5: #{softtriple_net_forward.3} parent=1 // pred_fallthru
      _
    // Predicated region
    $region6: #{softtriple_net_forward.3} parent=1 // pred_check
      _
    $region7: #{softtriple_net_forward.3} parent=1 // pred_check_branch
      %12 = sbr.rel (0) target = $region9
    $region8: #{softtriple_net_forward.3} parent=1 // pred_region
      _
    $region9: #{softtriple_net_forward.3} parent=1 // pred_fallthru
      _
    // Predicated region
    $region10: #{softtriple_net_forward.3} parent=1 // pred_check
      _
    $region11: #{softtriple_net_forward.3} parent=1 // pred_check_branch
      %14 = sbr.rel (0) target = $region13
    $region12: #{softtriple_net_forward.3} parent=1 // pred_region
      _
    $region13: #{softtriple_net_forward.3} parent=1 // pred_fallthru
      _
    %v15 = vld [vmem:[%s0] sm:$0x3]
    %v16 = vld [vmem:[%s1] sm:$0xff]
    %v17 = vld [vmem:[%s1 + $0x8] sm:$0xff]
    %v18 = vld [vmem:[%s1 + $0x10] sm:$0xff]
    %v19 = vld [vmem:[%s1 + $0x18] sm:$0xff]
    %v20 = vld [vmem:[%s1 + $0x20] sm:$0xff]
    %v21 = vld [vmem:[%s1 + $0x28] sm:$0xff]
    %v22 = vld [vmem:[%s1 + $0x30] sm:$0xff]
    %v23 = vld [vmem:[%s1 + $0x38] sm:$0xff]
    %v24 = vld [vmem:[%s1 + $0x40] sm:$0xff]
    %v25 = vld [vmem:[%s1 + $0x48] sm:$0xff]
    %v26 = vld [vmem:[%s1 + $0x50] sm:$0xff]
    %v27 = vld [vmem:[%s1 + $0x58] sm:$0xff]
    %v28 = vld [vmem:[%s1 + $0x60] sm:$0xff]
    %v29 = vld [vmem:[%s1 + $0x68] sm:$0xff]
    %v30 = vld [vmem:[%s1 + $0x70] sm:$0xff]
    %v31 = vld [vmem:[%s1 + $0x78] sm:$0xff]
    %v32 = vld [vmem:[%s2] sm:$0x3]
    %v33 = vlaneseq
    %v34 = vand.u32 %v33, 127
    %vm35 = vcmp.lt.s32.totalorder %v34, 99
    %v36 = vmul.f32 %v16, %v16
    %v37 = vmul.f32 %v17, %v17
    %v38 = vmul.f32 %v18, %v18
    %v39 = vmul.f32 %v19, %v19
    %v40 = vmul.f32 %v20, %v20
    %v41 = vmul.f32 %v21, %v21
    %v42 = vmul.f32 %v22, %v22
    %v43 = vmul.f32 %v23, %v23
    %v44 = vmul.f32 %v24, %v24
    %v45 = vmul.f32 %v25, %v25
    %v46 = vmul.f32 %v26, %v26
    %v47 = vmul.f32 %v27, %v27
    %v48 = vmul.f32 %v28, %v28
    %v49 = vmul.f32 %v29, %v29
    %v50 = vmul.f32 %v30, %v30
    %v51 = vmul.f32 %v31, %v31
    %v52 = vadd.f32 %v36, %v38
    %v53 = vadd.f32 %v52, %v40
    %v54 = vadd.f32 %v53, %v42
    %v55 = vadd.f32 %v54, %v44
    %v56 = vadd.f32 %v55, %v46
    %v57 = vadd.f32 %v56, %v48
    %v58 = vadd.f32 %v57, %v50
    %v59 = vrot.slane %v58, 4
    %v60 = vadd.f32 %v58, %v59
    %v61 = vrot.slane %v60, 2
    %v62 = vadd.f32 %v60, %v61
    %v63 = vrot.slane %v62, 1
    %v64 = vadd.f32 %v62, %v63
    %v65 = vadd.f32 %v37, %v39
    %v66 = vadd.f32 %v65, %v41
    %v67 = vadd.f32 %v66, %v43
    %v68 = vadd.f32 %v67, %v45
    %v69 = vadd.f32 %v68, %v47
    %v70 = vadd.f32 %v69, %v49
    %v71 = vadd.f32 %v70, %v51
    %v72 = vrot.slane %v71, 4
    %v73 = vadd.f32 %v71, %v72
    %v74 = vrot.slane %v73, 2
    %v75 = vadd.f32 %v73, %v74
    %v76 = vrot.slane %v75, 1
    %v77 = vadd.f32 %v75, %v76
    %v78 = vadd.f32 %v64, 1e-12
    %v79 = vadd.f32 %v77, 1e-12
    %v80 = vrsqrt.pop %v78
    %v81 = vmul.f32 %v80, %v78
    %v82 = vmul.f32 %v81, %v80
    %v83 = vmul.f32 0.5, %v82
    %v84 = vsub.f32 1.5, %v83
    %v85 = vmul.f32 %v80, %v84
    %vm86 = vweird.f32 %v78
    %vm87 = vweird.f32 %v80
    %vm88 = vmor %vm86, %vm87
    %v89 = vsel %vm88, %v80, %v85
    %v90 = vrsqrt.pop %v79
    %v91 = vmul.f32 %v90, %v79
    %v92 = vmul.f32 %v91, %v90
    %v93 = vmul.f32 0.5, %v92
    %v94 = vsub.f32 1.5, %v93
    %v95 = vmul.f32 %v90, %v94
    %vm96 = vweird.f32 %v79
    %vm97 = vweird.f32 %v90
    %vm98 = vmor %vm96, %vm97
    %v99 = vsel %vm98, %v90, %v95
    %v100 = vmul.f32 %v16, %v89
    %v101 = vmul.f32 %v17, %v99
    %v102 = vmul.f32 %v18, %v89
    %v103 = vmul.f32 %v19, %v99
    %v104 = vmul.f32 %v20, %v89
    %v105 = vmul.f32 %v21, %v99
    %v106 = vmul.f32 %v22, %v89
    %v107 = vmul.f32 %v23, %v99
    %v108 = vmul.f32 %v24, %v89
    %v109 = vmul.f32 %v25, %v99
    %v110 = vmul.f32 %v26, %v89
    %v111 = vmul.f32 %v27, %v99
    %v112 = vmul.f32 %v28, %v89
    %v113 = vmul.f32 %v29, %v99
    %v114 = vmul.f32 %v30, %v89
    %v115 = vmul.f32 %v31, %v99
    %vm116 = vcmask 523264
    %v118 = vsel %vm116, %v15, 0
    %120 = vmatpush.msra.mxu0 0.0
    %121 = vmatpush.msra.mxu0 0.0
    %122 = vmatpush.msra.mxu0 0.0
    %123 = vmatpush.msra.mxu0 0.0
    %124 = vmatpush.msra.mxu0 0.0
    %125 = vmatpush.msra.mxu0 0.0
    %126 = vmatpush.msra.mxu0 0.0
    %127 = vmatpush.msra.mxu0 0.0
    %128 = vmatpush.msra.mxu0 %v114
    %129 = vmatpush.msra.mxu0 %v112
    %130 = vmatpush.msra.mxu0 %v110
    %131 = vmatpush.msra.mxu0 %v108
    %132 = vmatpush.msra.mxu0 %v106
    %133 = vmatpush.msra.mxu0 %v104
    %134 = vmatpush.msra.mxu0 %v102
    %135 = vmatpush.msra.mxu0 %v100
    %136 = vmatmul.f32.gmra.mxu0 %v118
    %v137 = vpop.f32.mrf.mxu0
    %v138 = vadd.f32 0.0, %v137
    %139 = vdwg.mxu0
    %140 = vmatpush.msra.mxu0 0.0
    %141 = vmatpush.msra.mxu0 0.0
    %142 = vmatpush.msra.mxu0 0.0
    %143 = vmatpush.msra.mxu0 0.0
    %144 = vmatpush.msra.mxu0 0.0
    %145 = vmatpush.msra.mxu0 0.0
    %146 = vmatpush.msra.mxu0 0.0
    %147 = vmatpush.msra.mxu0 0.0
    %148 = vmatpush.msra.mxu0 %v115
    %149 = vmatpush.msra.mxu0 %v113
    %150 = vmatpush.msra.mxu0 %v111
    %151 = vmatpush.msra.mxu0 %v109
    %152 = vmatpush.msra.mxu0 %v107
    %153 = vmatpush.msra.mxu0 %v105
    %154 = vmatpush.msra.mxu0 %v103
    %155 = vmatpush.msra.mxu0 %v101
    %156 = vmatmul.f32.gmra.mxu0 %v118
    %v157 = vpop.f32.mrf.mxu0
    %v158 = vadd.f32 0.0, %v157
    %159 = vdwg.mxu0
    %v160 = vmax.f32 %v138, %v158
    %v161 = vsub.f32 %v138, %v160
    %v162 = vmul.f32 %v161, 10.0
    %v163 = vmul.f32 %v162, 1.442695
    %v164 = vpow.pop %v163
    %v165 = vsub.f32 %v158, %v160
    %v166 = vmul.f32 %v165, 10.0
    %v167 = vmul.f32 %v166, 1.442695
    %v168 = vpow.pop %v167
    %v169 = vadd.f32 %v164, %v168
    %v170 = vrcp.pop %v169
    %v171 = vmul.f32 %v164, %v170
    %v172 = vmul.f32 %v171, %v138
    %v173 = vmul.f32 %v168, %v170
    %v174 = vmul.f32 %v173, %v158
    %v175 = vadd.f32 %v172, %v174
    %v176 = vmul.f32 %v32, 0.01
    %v177 = vsub.f32 %v175, %v176
    %v178 = vmul.f32 %v177, 20.0
    %v179 = vsel %vm35, 1, 0
    %vm180 = vcmp.eq.s32.totalorder %v179, 1
    %v181 = vsel %vm180, %v178, -1e+30
    %vm182 = vcmask 1041408
    %v183 = vsel %vm182, %v181, -inf
    %184 = vmax.xlane.f32.xlu0 %v183
    %v185 = vpop.xlane.xlu0 %184
    %v186 = vsub.f32 %v181, %v185
    %v187 = vmul.f32 %v186, 1.442695
    %v188 = vpow.pop %v187
    %v189 = vsel %vm182, %v188, 0.0
    %190 = vadd.xlane.f32.xlu0 %v189
    %v191 = vpop.xlane.xlu0 %190
    %v192 = vlog2.pop %v191
    %v193 = vmul.f32 %v192, 0.6931472
    %v194 = vadd.f32 %v185, %v193
    %v195 = vmul.f32 %v32, %v181
    %v196 = vsel %vm182, %v195, 0.0
    %197 = vadd.xlane.f32.xlu0 %v196
    %v198 = vpop.xlane.xlu0 %197
    %v199 = vsub.f32 %v194, %v198
    %vm200 = vcmask 1024
    %v201 = vsel %vm200, %v199, 0.0
    %202 = vadd.xlane.f32.xlu0 %v201
    %v203 = vpop.xlane.xlu0 %202
    %v204 = vrot.slane %v203, 4
    %v205 = vadd.f32 %v203, %v204
    %v206 = vrot.slane %v205, 2
    %v207 = vadd.f32 %v205, %v206
    %v208 = vrot.slane %v207, 1
    %v209 = vadd.f32 %v207, %v208
    %s210 = vtos %v209
    %s211 = smul.f32 %s210, 0.5
    %v212 = vmul.f32 %v100, %v101
    %v213 = vmul.f32 %v102, %v103
    %v214 = vmul.f32 %v104, %v105
    %v215 = vmul.f32 %v106, %v107
    %v216 = vmul.f32 %v108, %v109
    %v217 = vmul.f32 %v110, %v111
    %v218 = vmul.f32 %v112, %v113
    %v219 = vmul.f32 %v114, %v115
    %v220 = vadd.f32 %v212, %v213
    %v221 = vadd.f32 %v220, %v214
    %v222 = vadd.f32 %v221, %v215
    %v223 = vadd.f32 %v222, %v216
    %v224 = vadd.f32 %v223, %v217
    %v225 = vadd.f32 %v224, %v218
    %v226 = vadd.f32 %v225, %v219
    %v227 = vrot.slane %v226, 4
    %v228 = vadd.f32 %v226, %v227
    %v229 = vrot.slane %v228, 2
    %v230 = vadd.f32 %v228, %v229
    %v231 = vrot.slane %v230, 1
    %v232 = vadd.f32 %v230, %v231
    %v233 = vmul.f32 %v232, 2.0
    %v234 = vsub.f32 2.00001, %v233
    %v235 = vmax.f32 %v234, 0.0
    %v236 = vrsqrt.pop %v235
    %v237 = vmul.f32 %v236, %v235
    %v238 = vmul.f32 %v237, %v236
    %v239 = vmul.f32 0.5, %v238
    %v240 = vsub.f32 1.5, %v239
    %v241 = vmul.f32 %v236, %v240
    %v242 = vmul.f32 %v235, %v241
    %vm243 = vcmp.eq.f32.partialorder %v235, inf
    %v244 = vsel %vm243, %v235, %v242
    %vm245 = vcmp.eq.f32.partialorder %v235, 0.0
    %v246 = vand.u32 %v235, 2147483648
    %v247 = vsel %vm245, %v246, %v244
    %v248 = vsel %vm35, %v247, 0.0
    %vm249 = vcmask 1040384
    %v250 = vsel %vm249, %v248, 0.0
    %251 = vadd.xlane.f32.xlu0 %v250
    %v252 = vpop.xlane.xlu0 %251
    %v253 = vrot.slane %v252, 4
    %v254 = vadd.f32 %v252, %v253
    %v255 = vrot.slane %v254, 2
    %v256 = vadd.f32 %v254, %v255
    %v257 = vrot.slane %v256, 1
    %v258 = vadd.f32 %v256, %v257
    %s259 = vtos %v258
    %s260 = sadd.f32 %s259, 0.0
    %v261 = vrcp.pop 198.0
    %v262 = vmul.f32 198.0, %v261
    %v263 = vsub.f32 1.0, %v262
    %v264 = vmul.f32 %v261, %v263
    %v265 = vadd.f32 %v261, %v264
    %vm266 = vweird.f32 %v261
    %v267 = vsel %vm266, %v261, %v265
    %s268 = vtos %v267
    %s269 = smul.f32 %s260, %s268
    %s270 = smul.f32 %s269, 0.2
    %s271 = sadd.f32 %s211, %s270
    %v272 = vstv %s271
    %v273 = vadd.f32 %v272, 0.0
    %vm274 = vcmask 0
    %275 = vst.msk [vmem:[#allocation2] sm:$0x1] %vm274, %v273
    // Predicated region
    $region14: #{softtriple_net_forward.3} parent=1 // pred_check
      _
    $region15: #{softtriple_net_forward.3} parent=1 // pred_check_branch
      %277 = sbr.rel (0) target = $region17
    $region16: #{softtriple_net_forward.3} parent=1 // pred_region
      %279 = vsyncadd [#allocation3], 0
      %s281 = sshll.u32 [#allocation2], 4
      %s282 = int_to_ptr.vmem [resolvable:$true] %s281
      %s283 = sshll.u32 %s3, 4
      %s284 = int_to_ptr.hbm [resolvable:$true] %s283
      %286 = dma.vmem_to_hbm [thread:$0]  %s282, 16, %s284, [#allocation3]
    $region17: #{softtriple_net_forward.3} parent=1 // pred_fallthru
      _
    // Predicated region
    $region18: #{softtriple_net_forward.3} parent=1 // pred_check
      _
    $region19: #{softtriple_net_forward.3} parent=1 // pred_check_branch
      %288 = sbr.rel (0) target = $region21
    $region20: #{softtriple_net_forward.3} parent=1 // pred_region
      %290 = dma.done [#allocation3], 16
    $region21: #{softtriple_net_forward.3} parent=1 // pred_fallthru
      _
    %291 = vsyncpa [#allocation3], 1

// kernel: softtriple_net_forward.2
$region0: #{softtriple_net_forward.2}
  #allocation0 [shape = 'u32[]', space=smem, size = 0x4, offset = 0x4, fixed_abs, tag = 'smem constant byte address 0x4 - core index']
  #allocation1 [shape = 'u32[72,128]{1,0:T(1,128)}', space=vmem, size = 0x9000, scoped, tag = 'internal scratch']
  %s0 = inlined_call_operand.vmem [shape: f32[2,18,18,4], index: 0, kind: input, shape index: {}]
  %s1 = inlined_call_operand.vmem [shape: f32[9,4,32], index: 1, kind: input, shape index: {}]
  %s2 = inlined_call_operand.vmem [shape: f32[1,32], index: 2, kind: input, shape index: {}]
  %s3 = inlined_call_operand.vmem [shape: f32[32,64], index: 3, kind: input, shape index: {}]
  %s4 = inlined_call_operand.vmem [shape: f32[1,64], index: 4, kind: input, shape index: {}]
  %s5 = inlined_call_operand.vmem [shape: f32[2,1,64], index: 5, kind: output, shape index: {}]
  %s6 = sld [smem:[#allocation0]]
  $region53: #{softtriple_net_forward.2} parent=0
    _
  %s8 = ssub.s32 1, %s6
  %s9 = scalar_select 0, %s8, %s6
  loop: start=0, step=1, limit=4
  $region2: #{softtriple_net_forward.2} parent=0 // loop_pre_header
    _
  $region3: #{softtriple_net_forward.2} parent=0 // loop_header
    %s11 = sphi 0, %s15
    %p12 = scmp.ge.s32.totalorder %s11, 4
    %s21 = sphi 0, %s23
    %s24 = sphi 0, %s21
    %s25 = sphi 0, %s24
    %s41 = sphi 0, %s25
    %s45 = sphi 0, %s45
    %s47 = sphi 0, %s45
    %s48 = sphi 0, %s47
    %s62 = sphi 0, %s48
    %s66 = sphi 0, %s66
    %s68 = sphi 0, %s66
    %s69 = sphi 0, %s68
    %s83 = sphi 0, %s69
    %s87 = sphi 0, %s87
    %s89 = sphi 0, %s87
    %s90 = sphi 0, %s89
    %s104 = sphi 0, %s90
    %s108 = sphi 0, %s108
    %s110 = sphi 0, %s108
    %s111 = sphi 0, %s110
    %s125 = sphi 0, %s111
    %s131 = sphi 0, %s133
    %s134 = sphi 0, %s131
    %s135 = sphi 0, %s134
    %s151 = sphi 0, %s135
  $region4: #{softtriple_net_forward.2} parent=0 // loop_header_branch
    %14 = sbr.rel (%p12) target = $region8
  $region5: #{softtriple_net_forward.2} parent=0 // loop_body
    %s16 = ssub.s32 %s11, 1
    %s17 = ssub.s32 %s11, 2
    %s18 = sadd.s32 %s11, 1
    %s19 = ssub.s32 %s11, %s18
    %p20 = scmp.eq.s32.totalorder %s19, 0
    %s22 = sadd.s32 %s21, 1
    %s23 = scalar_select %p20, %s21, %s22
    %p26 = pneg %p20
    %p27 = scmp.eq.s32.totalorder %s11, 1
    %p28 = por %p26, %p27
    %p29 = scmp.ne.s32.totalorder %s21, %s24
    %p30 = scmp.eq.s32.totalorder %s11, 0
    %p31 = por %p29, %p30
    %p32 = scmp.ne.s32.totalorder %s21, %s24
    %p33 = scmp.eq.s32.totalorder %s16, 1
    %p34 = por %p32, %p33
    %p35 = scmp.ne.s32.totalorder %s24, %s25
    %p36 = scmp.eq.s32.totalorder %s16, 0
    %p37 = por %p35, %p36
    %p38 = scmp.ne.s32.totalorder %s24, %s25
    %p39 = scmp.eq.s32.totalorder %s17, 1
    %p40 = por %p38, %p39
    %p42 = scmp.ne.s32.totalorder %s25, %s41
    %p43 = scmp.eq.s32.totalorder %s17, 0
    %p44 = por %p42, %p43
    %s46 = sadd.s32 %s45, 1
    %p49 = scmp.eq.s32.totalorder %s11, 1
    %p50 = scmp.ne.s32.totalorder %s45, %s47
    %p51 = scmp.eq.s32.totalorder %s11, 0
    %p52 = por %p50, %p51
    %p53 = scmp.ne.s32.totalorder %s45, %s47
    %p54 = scmp.eq.s32.totalorder %s16, 1
    %p55 = por %p53, %p54
    %p56 = scmp.ne.s32.totalorder %s47, %s48
    %p57 = scmp.eq.s32.totalorder %s16, 0
    %p58 = por %p56, %p57
    %p59 = scmp.ne.s32.totalorder %s47, %s48
    %p60 = scmp.eq.s32.totalorder %s17, 1
    %p61 = por %p59, %p60
    %p63 = scmp.ne.s32.totalorder %s48, %s62
    %p64 = scmp.eq.s32.totalorder %s17, 0
    %p65 = por %p63, %p64
    %s67 = sadd.s32 %s66, 1
    %p70 = scmp.eq.s32.totalorder %s11, 1
    %p71 = scmp.ne.s32.totalorder %s66, %s68
    %p72 = scmp.eq.s32.totalorder %s11, 0
    %p73 = por %p71, %p72
    %p74 = scmp.ne.s32.totalorder %s66, %s68
    %p75 = scmp.eq.s32.totalorder %s16, 1
    %p76 = por %p74, %p75
    %p77 = scmp.ne.s32.totalorder %s68, %s69
    %p78 = scmp.eq.s32.totalorder %s16, 0
    %p79 = por %p77, %p78
    %p80 = scmp.ne.s32.totalorder %s68, %s69
    %p81 = scmp.eq.s32.totalorder %s17, 1
    %p82 = por %p80, %p81
    %p84 = scmp.ne.s32.totalorder %s69, %s83
    %p85 = scmp.eq.s32.totalorder %s17, 0
    %p86 = por %p84, %p85
    %s88 = sadd.s32 %s87, 1
    %p91 = scmp.eq.s32.totalorder %s11, 1
    %p92 = scmp.ne.s32.totalorder %s87, %s89
    %p93 = scmp.eq.s32.totalorder %s11, 0
    %p94 = por %p92, %p93
    %p95 = scmp.ne.s32.totalorder %s87, %s89
    %p96 = scmp.eq.s32.totalorder %s16, 1
    %p97 = por %p95, %p96
    %p98 = scmp.ne.s32.totalorder %s89, %s90
    %p99 = scmp.eq.s32.totalorder %s16, 0
    %p100 = por %p98, %p99
    %p101 = scmp.ne.s32.totalorder %s89, %s90
    %p102 = scmp.eq.s32.totalorder %s17, 1
    %p103 = por %p101, %p102
    %p105 = scmp.ne.s32.totalorder %s90, %s104
    %p106 = scmp.eq.s32.totalorder %s17, 0
    %p107 = por %p105, %p106
    %s109 = sadd.s32 %s108, 1
    %p112 = scmp.eq.s32.totalorder %s11, 1
    %p113 = scmp.ne.s32.totalorder %s108, %s110
    %p114 = scmp.eq.s32.totalorder %s11, 0
    %p115 = por %p113, %p114
    %p116 = scmp.ne.s32.totalorder %s108, %s110
    %p117 = scmp.eq.s32.totalorder %s16, 1
    %p118 = por %p116, %p117
    %p119 = scmp.ne.s32.totalorder %s110, %s111
    %p120 = scmp.eq.s32.totalorder %s16, 0
    %p121 = por %p119, %p120
    %p122 = scmp.ne.s32.totalorder %s110, %s111
    %p123 = scmp.eq.s32.totalorder %s17, 1
    %p124 = por %p122, %p123
    %p126 = scmp.ne.s32.totalorder %s111, %s125
    %p127 = scmp.eq.s32.totalorder %s17, 0
    %p128 = por %p126, %p127
    %s129 = ssub.s32 %s11, %s18
    %p130 = scmp.eq.s32.totalorder %s129, 0
    %s132 = sadd.s32 %s131, 1
    %s133 = scalar_select %p130, %s131, %s132
    %p136 = pneg %p130
    %p137 = scmp.eq.s32.totalorder %s11, 1
    %p138 = por %p136, %p137
    %p139 = scmp.ne.s32.totalorder %s131, %s134
    %p140 = scmp.eq.s32.totalorder %s11, 0
    %p141 = por %p139, %p140
    %p142 = scmp.ne.s32.totalorder %s131, %s134
    %p143 = scmp.eq.s32.totalorder %s16, 1
    %p144 = por %p142, %p143
    %p145 = scmp.ne.s32.totalorder %s134, %s135
    %p146 = scmp.eq.s32.totalorder %s16, 0
    %p147 = por %p145, %p146
    %p148 = scmp.ne.s32.totalorder %s134, %s135
    %p149 = scmp.eq.s32.totalorder %s17, 1
    %p150 = por %p148, %p149
    %p152 = scmp.ne.s32.totalorder %s135, %s151
    %p153 = scmp.eq.s32.totalorder %s17, 0
    %p154 = por %p152, %p153
    %p155 = scmp.le.s32.totalorder 1, %s11
    %p156 = scmp.lt.s32.totalorder %s11, 3
    %p157 = pnand %p155, %p156
    %p158 = pneg %p157
    // Predicated region
    $region9: #{softtriple_net_forward.2} parent=5 // pred_check
      _
    $region10: #{softtriple_net_forward.2} parent=5 // pred_check_branch
      %160 = sbr.rel (%p157) target = $region12
    $region11: #{softtriple_net_forward.2} parent=5 // pred_region
      %s161 = ssub.s32 %s11, 1
      // Predicated region
      $region13: #{softtriple_net_forward.2} parent=11 // pred_check
        %p162 = pneg %p58
      $region14: #{softtriple_net_forward.2} parent=11 // pred_check_branch
        %164 = sbr.rel (%p162) target = $region16
      $region15: #{softtriple_net_forward.2} parent=11 // pred_region
        _
      $region16: #{softtriple_net_forward.2} parent=11 // pred_fallthru
        _
      // Predicated region
      $region17: #{softtriple_net_forward.2} parent=11 // pred_check
        %p165 = pneg %p79
      $region18: #{softtriple_net_forward.2} parent=11 // pred_check_branch
        %167 = sbr.rel (%p165) target = $region20
      $region19: #{softtriple_net_forward.2} parent=11 // pred_region
        _
      $region20: #{softtriple_net_forward.2} parent=11 // pred_fallthru
        _
      // Predicated region
      $region21: #{softtriple_net_forward.2} parent=11 // pred_check
        %p168 = pneg %p100
      $region22: #{softtriple_net_forward.2} parent=11 // pred_check_branch
        %170 = sbr.rel (%p168) target = $region24
      $region23: #{softtriple_net_forward.2} parent=11 // pred_region
        _
      $region24: #{softtriple_net_forward.2} parent=11 // pred_fallthru
        _
      // Predicated region
      $region25: #{softtriple_net_forward.2} parent=11 // pred_check
        %p171 = pneg %p121
      $region26: #{softtriple_net_forward.2} parent=11 // pred_check_branch
        %173 = sbr.rel (%p171) target = $region28
      $region27: #{softtriple_net_forward.2} parent=11 // pred_region
        _
      $region28: #{softtriple_net_forward.2} parent=11 // pred_fallthru
        _
    $region12: #{softtriple_net_forward.2} parent=5 // pred_fallthru
      _
    %p174 = scmp.lt.s32.totalorder %s11, 2
    // Predicated region
    $region29: #{softtriple_net_forward.2} parent=5 // pred_check
      %p175 = pneg %p174
    $region30: #{softtriple_net_forward.2} parent=5 // pred_check_branch
      %177 = sbr.rel (%p175) target = $region32
    $region31: #{softtriple_net_forward.2} parent=5 // pred_region
      // Predicated region
      $region33: #{softtriple_net_forward.2} parent=31 // pred_check
        %p178 = pneg %p31
      $region34: #{softtriple_net_forward.2} parent=31 // pred_check_branch
        %180 = sbr.rel (%p178) target = $region36
      $region35: #{softtriple_net_forward.2} parent=31 // pred_region
        %p181 = scmp.lt.s32.totalorder %s11, 1
        %s182 = scalar_select %p181, %s11, 1
        %s183 = smul.addr %s182, 54
        %s184 = smul.addr %s183, 8
        %s185 = scalar_lea.vmem %s0, %s184
      $region36: #{softtriple_net_forward.2} parent=31 // pred_fallthru
        _
    $region32: #{softtriple_net_forward.2} parent=5 // pred_fallthru
      _
    %p186 = scmp.le.s32.totalorder 1, %s11
    %p187 = scmp.lt.s32.totalorder %s11, 3
    %p188 = pnand %p186, %p187
    %p189 = pneg %p188
    // Predicated region
    $region37: #{softtriple_net_forward.2} parent=5 // pred_check
      _
    $region38: #{softtriple_net_forward.2} parent=5 // pred_check_branch
      %191 = sbr.rel (%p188) target = $region40
    $region39: #{softtriple_net_forward.2} parent=5 // pred_region
      %s192 = ssub.s32 %s11, 1
      %p193 = scmp.lt.s32.totalorder %s16, 1
      %s194 = scalar_select %p193, %s16, 1
      %s195 = smul.addr %s194, 54
      %s196 = smul.addr %s195, 8
      %s197 = scalar_lea.vmem %s0, %s196
      %p198 = pneg %p37
      %p199 = pneg %p34
      %p200 = pneg %p58
      %p201 = pneg %p55
      %p202 = pneg %p79
      %p203 = pneg %p76
      %p204 = pneg %p100
      %p205 = pneg %p97
      %p206 = pneg %p121
      %p207 = pneg %p118
      %p208 = pneg %p147
      %p209 = pneg %p144
      %p210 = scmp.lt.s32.totalorder %s16, 1
      %s211 = scalar_select %p210, %s16, 1
      %s212 = scalar_lea.vmem %s5, %s211
      %p213 = scmp.lt.s32.totalorder %s16, 1
      %s214 = scalar_select %p213, %s16, 1
      %s215 = smul.addr %s214, 54
      %s216 = smul.addr %s215, 8
      %s217 = scalar_lea.vmem %s0, %s216
      %p218 = scmp.lt.s32.totalorder %s16, 1
      %s219 = scalar_select %p218, %s16, 1
      %s220 = scalar_lea.vmem %s5, %s219
      %v221 = vld [vmem:[%s217] sm:$0xff]
      %v222 = vld [vmem:[%s217 + $0x8] sm:$0xff]
      %v223 = vld [vmem:[%s217 + $0x18] sm:$0xff]
      %v224 = vld [vmem:[%s217 + $0x20] sm:$0xff]
      %v225 = vld [vmem:[%s217 + $0x30] sm:$0xff]
      %v226 = vld [vmem:[%s217 + $0x38] sm:$0xff]
      %v227 = vld [vmem:[%s217 + $0x48] sm:$0xff]
      %v228 = vld [vmem:[%s217 + $0x50] sm:$0xff]
      %v229 = vld [vmem:[%s217 + $0x60] sm:$0xff]
      %v230 = vld [vmem:[%s217 + $0x68] sm:$0xff]
      %v231 = vld [vmem:[%s217 + $0x78] sm:$0xff]
      %v232 = vld [vmem:[%s217 + $0x80] sm:$0xff]
      %v233 = vld [vmem:[%s217 + $0x90] sm:$0xff]
      %v234 = vld [vmem:[%s217 + $0x98] sm:$0xff]
      %v235 = vld [vmem:[%s217 + $0xa8] sm:$0xff]
      %v236 = vld [vmem:[%s217 + $0xb0] sm:$0xff]
      %v237 = vld [vmem:[%s217 + $0xc0] sm:$0xff]
      %v238 = vld [vmem:[%s217 + $0xc8] sm:$0xff]
      %v239 = vld [vmem:[%s217 + $0xd8] sm:$0xff]
      %v240 = vld [vmem:[%s217 + $0xe0] sm:$0xff]
      %v241 = vld [vmem:[%s217 + $0xf0] sm:$0xff]
      %v242 = vld [vmem:[%s217 + $0xf8] sm:$0xff]
      %v243 = vld [vmem:[%s217 + $0x108] sm:$0xff]
      %v244 = vld [vmem:[%s217 + $0x110] sm:$0xff]
      %v245 = vld [vmem:[%s217 + $0x120] sm:$0xff]
      %v246 = vld [vmem:[%s217 + $0x128] sm:$0xff]
      %v247 = vld [vmem:[%s217 + $0x138] sm:$0xff]
      %v248 = vld [vmem:[%s217 + $0x140] sm:$0xff]
      %v249 = vld [vmem:[%s217 + $0x150] sm:$0xff]
      %v250 = vld [vmem:[%s217 + $0x158] sm:$0xff]
      %v251 = vld [vmem:[%s217 + $0x168] sm:$0xff]
      %v252 = vld [vmem:[%s217 + $0x170] sm:$0xff]
      %v253 = vld [vmem:[%s1] sm:$0xf]
      %v254 = vld [vmem:[%s217 + $0x1] sm:$0xff]
      %v255 = vld [vmem:[%s217 + $0x9] sm:$0xff]
      %v256 = vld [vmem:[%s217 + $0x19] sm:$0xff]
      %v257 = vld [vmem:[%s217 + $0x21] sm:$0xff]
      %v258 = vld [vmem:[%s217 + $0x31] sm:$0xff]
      %v259 = vld [vmem:[%s217 + $0x39] sm:$0xff]
      %v260 = vld [vmem:[%s217 + $0x49] sm:$0xff]
      %v261 = vld [vmem:[%s217 + $0x51] sm:$0xff]
      %v262 = vld [vmem:[%s217 + $0x61] sm:$0xff]
      %v263 = vld [vmem:[%s217 + $0x69] sm:$0xff]
      %v264 = vld [vmem:[%s217 + $0x79] sm:$0xff]
      %v265 = vld [vmem:[%s217 + $0x81] sm:$0xff]
      %v266 = vld [vmem:[%s217 + $0x91] sm:$0xff]
      %v267 = vld [vmem:[%s217 + $0x99] sm:$0xff]
      %v268 = vld [vmem:[%s217 + $0xa9] sm:$0xff]
      %v269 = vld [vmem:[%s217 + $0xb1] sm:$0xff]
      %v270 = vld [vmem:[%s217 + $0xc1] sm:$0xff]
      %v271 = vld [vmem:[%s217 + $0xc9] sm:$0xff]
      %v272 = vld [vmem:[%s217 + $0xd9] sm:$0xff]
      %v273 = vld [vmem:[%s217 + $0xe1] sm:$0xff]
      %v274 = vld [vmem:[%s217 + $0xf1] sm:$0xff]
      %v275 = vld [vmem:[%s217 + $0xf9] sm:$0xff]
      %v276 = vld [vmem:[%s217 + $0x109] sm:$0xff]
      %v277 = vld [vmem:[%s217 + $0x111] sm:$0xff]
      %v278 = vld [vmem:[%s217 + $0x121] sm:$0xff]
      %v279 = vld [vmem:[%s217 + $0x129] sm:$0xff]
      %v280 = vld [vmem:[%s217 + $0x139] sm:$0xff]
      %v281 = vld [vmem:[%s217 + $0x141] sm:$0xff]
      %v282 = vld [vmem:[%s217 + $0x151] sm:$0xff]
      %v283 = vld [vmem:[%s217 + $0x159] sm:$0xff]
      %v284 = vld [vmem:[%s217 + $0x169] sm:$0xff]
      %v285 = vld [vmem:[%s217 + $0x171] sm:$0xff]
      %s286 = scalar_lea.vmem %s1, 4
      %v287 = vld [vmem:[%s286] sm:$0xf]
      %vm288 = vcmask 31744
      %v290 = vsel %vm288, %v254, 0
      %v293 = vsel %vm288, %v255, 0
      %v296 = vsel %vm288, %v256, 0
      %v299 = vsel %vm288, %v257, 0
      %v302 = vsel %vm288, %v258, 0
      %v305 = vsel %vm288, %v259, 0
      %v308 = vsel %vm288, %v260, 0
      %v311 = vsel %vm288, %v261, 0
      %v314 = vsel %vm288, %v262, 0
      %v317 = vsel %vm288, %v263, 0
      %v320 = vsel %vm288, %v264, 0
      %v323 = vsel %vm288, %v265, 0
      %v326 = vsel %vm288, %v266, 0
      %v329 = vsel %vm288, %v267, 0
      %v332 = vsel %vm288, %v268, 0
      %v335 = vsel %vm288, %v269, 0
      %v338 = vsel %vm288, %v270, 0
      %v341 = vsel %vm288, %v271, 0
      %v344 = vsel %vm288, %v272, 0
      %v347 = vsel %vm288, %v273, 0
      %v350 = vsel %vm288, %v274, 0
      %v353 = vsel %vm288, %v275, 0
      %v356 = vsel %vm288, %v276, 0
      %v359 = vsel %vm288, %v277, 0
      %v362 = vsel %vm288, %v278, 0
      %v365 = vsel %vm288, %v279, 0
      %v368 = vsel %vm288, %v280, 0
      %v371 = vsel %vm288, %v281, 0
      %v374 = vsel %vm288, %v282, 0
      %v377 = vsel %vm288, %v283, 0
      %v380 = vsel %vm288, %v284, 0
      %v383 = vsel %vm288, %v285, 0
      %vm385 = vcmask 1043456
      %v387 = vsel %vm385, %v287, 0
      %389 = vmatpush.msra.mxu0 0.0
      %390 = vmatpush.msra.mxu0 0.0
      %391 = vmatpush.msra.mxu0 0.0
      %392 = vmatpush.msra.mxu0 0.0
      %393 = vmatpush.msra.mxu0 0.0
      %394 = vmatpush.msra.mxu0 0.0
      %395 = vmatpush.msra.mxu0 0.0
      %396 = vmatpush.msra.mxu0 0.0
      %397 = vmatpush.msra.mxu0 0.0
      %398 = vmatpush.msra.mxu0 0.0
      %399 = vmatpush.msra.mxu0 0.0
      %400 = vmatpush.msra.mxu0 0.0
      %401 = vmatpush.msra.mxu0 0.0
      %402 = vmatpush.msra.mxu0 0.0
      %403 = vmatpush.msra.mxu0 0.0
      %404 = vmatpush.msra.mxu0 %v387
      %405 = vmatmul.f32.gmra.mxu0 %v290
      %v406 = vpop.f32.mrf.mxu0
      %v407 = vadd.f32 0.0, %v406
      %408 = vmatmul.f32.gmra.mxu0 %v293
      %v409 = vpop.f32.mrf.mxu0
      %v410 = vadd.f32 0.0, %v409
      %411 = vmatmul.f32.gmra.mxu0 %v296
      %v412 = vpop.f32.mrf.mxu0
      %v413 = vadd.f32 0.0, %v412
      %414 = vmatmul.f32.gmra.mxu0 %v299
      %v415 = vpop.f32.mrf.mxu0
      %v416 = vadd.f32 0.0, %v415
      %417 = vmatmul.f32.gmra.mxu0 %v302
      %v418 = vpop.f32.mrf.mxu0
      %v419 = vadd.f32 0.0, %v418
      %420 = vmatmul.f32.gmra.mxu0 %v305
      %v421 = vpop.f32.mrf.mxu0
      %v422 = vadd.f32 0.0, %v421
      %423 = vmatmul.f32.gmra.mxu0 %v308
      %v424 = vpop.f32.mrf.mxu0
      %v425 = vadd.f32 0.0, %v424
      %426 = vmatmul.f32.gmra.mxu0 %v311
      %v427 = vpop.f32.mrf.mxu0
      %v428 = vadd.f32 0.0, %v427
      %429 = vmatmul.f32.gmra.mxu0 %v314
      %v430 = vpop.f32.mrf.mxu0
      %v431 = vadd.f32 0.0, %v430
      %432 = vmatmul.f32.gmra.mxu0 %v317
      %v433 = vpop.f32.mrf.mxu0
      %v434 = vadd.f32 0.0, %v433
      %435 = vmatmul.f32.gmra.mxu0 %v320
      %v436 = vpop.f32.mrf.mxu0
      %v437 = vadd.f32 0.0, %v436
      %438 = vmatmul.f32.gmra.mxu0 %v323
      %v439 = vpop.f32.mrf.mxu0
      %v440 = vadd.f32 0.0, %v439
      %441 = vmatmul.f32.gmra.mxu0 %v326
      %v442 = vpop.f32.mrf.mxu0
      %v443 = vadd.f32 0.0, %v442
      %444 = vmatmul.f32.gmra.mxu0 %v329
      %v445 = vpop.f32.mrf.mxu0
      %v446 = vadd.f32 0.0, %v445
      %447 = vmatmul.f32.gmra.mxu0 %v332
      %v448 = vpop.f32.mrf.mxu0
      %v449 = vadd.f32 0.0, %v448
      %450 = vmatmul.f32.gmra.mxu0 %v335
      %v451 = vpop.f32.mrf.mxu0
      %v452 = vadd.f32 0.0, %v451
      %453 = vmatmul.f32.gmra.mxu0 %v338
      %v454 = vpop.f32.mrf.mxu0
      %v455 = vadd.f32 0.0, %v454
      %456 = vmatmul.f32.gmra.mxu0 %v341
      %v457 = vpop.f32.mrf.mxu0
      %v458 = vadd.f32 0.0, %v457
      %459 = vmatmul.f32.gmra.mxu0 %v344
      %v460 = vpop.f32.mrf.mxu0
      %v461 = vadd.f32 0.0, %v460
      %462 = vmatmul.f32.gmra.mxu0 %v347
      %v463 = vpop.f32.mrf.mxu0
      %v464 = vadd.f32 0.0, %v463
      %465 = vmatmul.f32.gmra.mxu0 %v350
      %v466 = vpop.f32.mrf.mxu0
      %v467 = vadd.f32 0.0, %v466
      %468 = vmatmul.f32.gmra.mxu0 %v353
      %v469 = vpop.f32.mrf.mxu0
      %v470 = vadd.f32 0.0, %v469
      %471 = vmatmul.f32.gmra.mxu0 %v356
      %v472 = vpop.f32.mrf.mxu0
      %v473 = vadd.f32 0.0, %v472
      %474 = vmatmul.f32.gmra.mxu0 %v359
      %v475 = vpop.f32.mrf.mxu0
      %v476 = vadd.f32 0.0, %v475
      %477 = vmatmul.f32.gmra.mxu0 %v362
      %v478 = vpop.f32.mrf.mxu0
      %v479 = vadd.f32 0.0, %v478
      %480 = vmatmul.f32.gmra.mxu0 %v365
      %v481 = vpop.f32.mrf.mxu0
      %v482 = vadd.f32 0.0, %v481
      %483 = vmatmul.f32.gmra.mxu0 %v368
      %v484 = vpop.f32.mrf.mxu0
      %v485 = vadd.f32 0.0, %v484
      %486 = vmatmul.f32.gmra.mxu0 %v371
      %v487 = vpop.f32.mrf.mxu0
      %v488 = vadd.f32 0.0, %v487
      %489 = vmatmul.f32.gmra.mxu0 %v374
      %v490 = vpop.f32.mrf.mxu0
      %v491 = vadd.f32 0.0, %v490
      %492 = vmatmul.f32.gmra.mxu0 %v377
      %v493 = vpop.f32.mrf.mxu0
      %v494 = vadd.f32 0.0, %v493
      %495 = vmatmul.f32.gmra.mxu0 %v380
      %v496 = vpop.f32.mrf.mxu0
      %v497 = vadd.f32 0.0, %v496
      %498 = vmatmul.f32.gmra.mxu0 %v383
      %v499 = vpop.f32.mrf.mxu0
      %v500 = vadd.f32 0.0, %v499
      %501 = vdwg.mxu0
      %v503 = vsel %vm288, %v221, 0
      %v506 = vsel %vm288, %v222, 0
      %v509 = vsel %vm288, %v223, 0
      %v512 = vsel %vm288, %v224, 0
      %v515 = vsel %vm288, %v225, 0
      %v518 = vsel %vm288, %v226, 0
      %v521 = vsel %vm288, %v227, 0
      %v524 = vsel %vm288, %v228, 0
      %v527 = vsel %vm288, %v229, 0
      %v530 = vsel %vm288, %v230, 0
      %v533 = vsel %vm288, %v231, 0
      %v536 = vsel %vm288, %v232, 0
      %v539 = vsel %vm288, %v233, 0
      %v542 = vsel %vm288, %v234, 0
      %v545 = vsel %vm288, %v235, 0
      %v548 = vsel %vm288, %v236, 0
      %v551 = vsel %vm288, %v237, 0
      %v554 = vsel %vm288, %v238, 0
      %v557 = vsel %vm288, %v239, 0
      %v560 = vsel %vm288, %v240, 0
      %v563 = vsel %vm288, %v241, 0
      %v566 = vsel %vm288, %v242, 0
      %v569 = vsel %vm288, %v243, 0
      %v572 = vsel %vm288, %v244, 0
      %v575 = vsel %vm288, %v245, 0
      %v578 = vsel %vm288, %v246, 0
      %v581 = vsel %vm288, %v247, 0
      %v584 = vsel %vm288, %v248, 0
      %v587 = vsel %vm288, %v249, 0
      %v590 = vsel %vm288, %v250, 0
      %v593 = vsel %vm288, %v251, 0
      %v596 = vsel %vm288, %v252, 0
      %v599 = vsel %vm385, %v253, 0
      %601 = vmatpush.msra.mxu0 0.0
      %602 = vmatpush.msra.mxu0 0.0
      %603 = vmatpush.msra.mxu0 0.0
      %604 = vmatpush.msra.mxu0 0.0
      %605 = vmatpush.msra.mxu0 0.0
      %606 = vmatpush.msra.mxu0 0.0
      %607 = vmatpush.msra.mxu0 0.0
      %608 = vmatpush.msra.mxu0 0.0
      %609 = vmatpush.msra.mxu0 0.0
      %610 = vmatpush.msra.mxu0 0.0
      %611 = vmatpush.msra.mxu0 0.0
      %612 = vmatpush.msra.mxu0 0.0
      %613 = vmatpush.msra.mxu0 0.0
      %614 = vmatpush.msra.mxu0 0.0
      %615 = vmatpush.msra.mxu0 0.0
      %616 = vmatpush.msra.mxu0 %v599
      %617 = vmatmul.f32.gmra.mxu0 %v503
      %v618 = vpop.f32.mrf.mxu0
      %v619 = vadd.f32 %v407, %v618
      %620 = vmatmul.f32.gmra.mxu0 %v506
      %v621 = vpop.f32.mrf.mxu0
      %v622 = vadd.f32 %v410, %v621
      %623 = vmatmul.f32.gmra.mxu0 %v509
      %v624 = vpop.f32.mrf.mxu0
      %v625 = vadd.f32 %v413, %v624
      %626 = vmatmul.f32.gmra.mxu0 %v512
      %v627 = vpop.f32.mrf.mxu0
      %v628 = vadd.f32 %v416, %v627
      %629 = vmatmul.f32.gmra.mxu0 %v515
      %v630 = vpop.f32.mrf.mxu0
      %v631 = vadd.f32 %v419, %v630
      %632 = vmatmul.f32.gmra.mxu0 %v518
      %v633 = vpop.f32.mrf.mxu0
      %v634 = vadd.f32 %v422, %v633
      %635 = vmatmul.f32.gmra.mxu0 %v521
      %v636 = vpop.f32.mrf.mxu0
      %v637 = vadd.f32 %v425, %v636
      %638 = vmatmul.f32.gmra.mxu0 %v524
      %v639 = vpop.f32.mrf.mxu0
      %v640 = vadd.f32 %v428, %v639
      %641 = vmatmul.f32.gmra.mxu0 %v527
      %v642 = vpop.f32.mrf.mxu0
      %v643 = vadd.f32 %v431, %v642
      %644 = vmatmul.f32.gmra.mxu0 %v530
      %v645 = vpop.f32.mrf.mxu0
      %v646 = vadd.f32 %v434, %v645
      %647 = vmatmul.f32.gmra.mxu0 %v533
      %v648 = vpop.f32.mrf.mxu0
      %v649 = vadd.f32 %v437, %v648
      %650 = vmatmul.f32.gmra.mxu0 %v536
      %v651 = vpop.f32.mrf.mxu0
      %v652 = vadd.f32 %v440, %v651
      %653 = vmatmul.f32.gmra.mxu0 %v539
      %v654 = vpop.f32.mrf.mxu0
      %v655 = vadd.f32 %v443, %v654
      %656 = vmatmul.f32.gmra.mxu0 %v542
      %v657 = vpop.f32.mrf.mxu0
      %v658 = vadd.f32 %v446, %v657
      %659 = vmatmul.f32.gmra.mxu0 %v545
      %v660 = vpop.f32.mrf.mxu0
      %v661 = vadd.f32 %v449, %v660
      %662 = vmatmul.f32.gmra.mxu0 %v548
      %v663 = vpop.f32.mrf.mxu0
      %v664 = vadd.f32 %v452, %v663
      %665 = vmatmul.f32.gmra.mxu0 %v551
      %v666 = vpop.f32.mrf.mxu0
      %v667 = vadd.f32 %v455, %v666
      %668 = vmatmul.f32.gmra.mxu0 %v554
      %v669 = vpop.f32.mrf.mxu0
      %v670 = vadd.f32 %v458, %v669
      %671 = vmatmul.f32.gmra.mxu0 %v557
      %v672 = vpop.f32.mrf.mxu0
      %v673 = vadd.f32 %v461, %v672
      %674 = vmatmul.f32.gmra.mxu0 %v560
      %v675 = vpop.f32.mrf.mxu0
      %v676 = vadd.f32 %v464, %v675
      %677 = vmatmul.f32.gmra.mxu0 %v563
      %v678 = vpop.f32.mrf.mxu0
      %v679 = vadd.f32 %v467, %v678
      %680 = vmatmul.f32.gmra.mxu0 %v566
      %v681 = vpop.f32.mrf.mxu0
      %v682 = vadd.f32 %v470, %v681
      %683 = vmatmul.f32.gmra.mxu0 %v569
      %v684 = vpop.f32.mrf.mxu0
      %v685 = vadd.f32 %v473, %v684
      %686 = vmatmul.f32.gmra.mxu0 %v572
      %v687 = vpop.f32.mrf.mxu0
      %v688 = vadd.f32 %v476, %v687
      %689 = vmatmul.f32.gmra.mxu0 %v575
      %v690 = vpop.f32.mrf.mxu0
      %v691 = vadd.f32 %v479, %v690
      %692 = vmatmul.f32.gmra.mxu0 %v578
      %v693 = vpop.f32.mrf.mxu0
      %v694 = vadd.f32 %v482, %v693
      %695 = vmatmul.f32.gmra.mxu0 %v581
      %v696 = vpop.f32.mrf.mxu0
      %v697 = vadd.f32 %v485, %v696
      %698 = vmatmul.f32.gmra.mxu0 %v584
      %v699 = vpop.f32.mrf.mxu0
      %v700 = vadd.f32 %v488, %v699
      %701 = vmatmul.f32.gmra.mxu0 %v587
      %v702 = vpop.f32.mrf.mxu0
      %v703 = vadd.f32 %v491, %v702
      %704 = vmatmul.f32.gmra.mxu0 %v590
      %v705 = vpop.f32.mrf.mxu0
      %v706 = vadd.f32 %v494, %v705
      %707 = vmatmul.f32.gmra.mxu0 %v593
      %v708 = vpop.f32.mrf.mxu0
      %v709 = vadd.f32 %v497, %v708
      %710 = vmatmul.f32.gmra.mxu0 %v596
      %v711 = vpop.f32.mrf.mxu0
      %v712 = vadd.f32 %v500, %v711
      %713 = vdwg.mxu0
      %v714 = vld [vmem:[%s217 + $0x2] sm:$0xff]
      %v715 = vld [vmem:[%s217 + $0xa] sm:$0xff]
      %v716 = vld [vmem:[%s217 + $0x1a] sm:$0xff]
      %v717 = vld [vmem:[%s217 + $0x22] sm:$0xff]
      %v718 = vld [vmem:[%s217 + $0x32] sm:$0xff]
      %v719 = vld [vmem:[%s217 + $0x3a] sm:$0xff]
      %v720 = vld [vmem:[%s217 + $0x4a] sm:$0xff]
      %v721 = vld [vmem:[%s217 + $0x52] sm:$0xff]
      %v722 = vld [vmem:[%s217 + $0x62] sm:$0xff]
      %v723 = vld [vmem:[%s217 + $0x6a] sm:$0xff]
      %v724 = vld [vmem:[%s217 + $0x7a] sm:$0xff]
      %v725 = vld [vmem:[%s217 + $0x82] sm:$0xff]
      %v726 = vld [vmem:[%s217 + $0x92] sm:$0xff]
      %v727 = vld [vmem:[%s217 + $0x9a] sm:$0xff]
      %v728 = vld [vmem:[%s217 + $0xaa] sm:$0xff]
      %v729 = vld [vmem:[%s217 + $0xb2] sm:$0xff]
      %v730 = vld [vmem:[%s217 + $0xc2] sm:$0xff]
      %v731 = vld [vmem:[%s217 + $0xca] sm:$0xff]
      %v732 = vld [vmem:[%s217 + $0xda] sm:$0xff]
      %v733 = vld [vmem:[%s217 + $0xe2] sm:$0xff]
      %v734 = vld [vmem:[%s217 + $0xf2] sm:$0xff]
      %v735 = vld [vmem:[%s217 + $0xfa] sm:$0xff]
      %v736 = vld [vmem:[%s217 + $0x10a] sm:$0xff]
      %v737 = vld [vmem:[%s217 + $0x112] sm:$0xff]
      %v738 = vld [vmem:[%s217 + $0x122] sm:$0xff]
      %v739 = vld [vmem:[%s217 + $0x12a] sm:$0xff]
      %v740 = vld [vmem:[%s217 + $0x13a] sm:$0xff]
      %v741 = vld [vmem:[%s217 + $0x142] sm:$0xff]
      %v742 = vld [vmem:[%s217 + $0x152] sm:$0xff]
      %v743 = vld [vmem:[%s217 + $0x15a] sm:$0xff]
      %v744 = vld [vmem:[%s217 + $0x16a] sm:$0xff]
      %v745 = vld [vmem:[%s217 + $0x172] sm:$0xff]
      %s746 = scalar_lea.vmem %s1, 8
      %v747 = vld [vmem:[%s746] sm:$0xf]
      %v749 = vsel %vm288, %v714, 0
      %v752 = vsel %vm288, %v715, 0
      %v755 = vsel %vm288, %v716, 0
      %v758 = vsel %vm288, %v717, 0
      %v761 = vsel %vm288, %v718, 0
      %v764 = vsel %vm288, %v719, 0
      %v767 = vsel %vm288, %v720, 0
      %v770 = vsel %vm288, %v721, 0
      %v773 = vsel %vm288, %v722, 0
      %v776 = vsel %vm288, %v723, 0
      %v779 = vsel %vm288, %v724, 0
      %v782 = vsel %vm288, %v725, 0
      %v785 = vsel %vm288, %v726, 0
      %v788 = vsel %vm288, %v727, 0
      %v791 = vsel %vm288, %v728, 0
      %v794 = vsel %vm288, %v729, 0
      %v797 = vsel %vm288, %v730, 0
      %v800 = vsel %vm288, %v731, 0
      %v803 = vsel %vm288, %v732, 0
      %v806 = vsel %vm288, %v733, 0
      %v809 = vsel %vm288, %v734, 0
      %v812 = vsel %vm288, %v735, 0
      %v815 = vsel %vm288, %v736, 0
      %v818 = vsel %vm288, %v737, 0
      %v821 = vsel %vm288, %v738, 0
      %v824 = vsel %vm288, %v739, 0
      %v827 = vsel %vm288, %v740, 0
      %v830 = vsel %vm288, %v741, 0
      %v833 = vsel %vm288, %v742, 0
      %v836 = vsel %vm288, %v743, 0
      %v839 = vsel %vm288, %v744, 0
      %v842 = vsel %vm288, %v745, 0
      %v845 = vsel %vm385, %v747, 0
      %847 = vmatpush.msra.mxu0 0.0
      %848 = vmatpush.msra.mxu0 0.0
      %849 = vmatpush.msra.mxu0 0.0
      %850 = vmatpush.msra.mxu0 0.0
      %851 = vmatpush.msra.mxu0 0.0
      %852 = vmatpush.msra.mxu0 0.0
      %853 = vmatpush.msra.mxu0 0.0
      %854 = vmatpush.msra.mxu0 0.0
      %855 = vmatpush.msra.mxu0 0.0
      %856 = vmatpush.msra.mxu0 0.0
      %857 = vmatpush.msra.mxu0 0.0
      %858 = vmatpush.msra.mxu0 0.0
      %859 = vmatpush.msra.mxu0 0.0
      %860 = vmatpush.msra.mxu0 0.0
      %861 = vmatpush.msra.mxu0 0.0
      %862 = vmatpush.msra.mxu0 %v845
      %863 = vmatmul.f32.gmra.mxu0 %v749
      %v864 = vpop.f32.mrf.mxu0
      %v865 = vadd.f32 0.0, %v864
      %866 = vmatmul.f32.gmra.mxu0 %v752
      %v867 = vpop.f32.mrf.mxu0
      %v868 = vadd.f32 0.0, %v867
      %869 = vmatmul.f32.gmra.mxu0 %v755
      %v870 = vpop.f32.mrf.mxu0
      %v871 = vadd.f32 0.0, %v870
      %872 = vmatmul.f32.gmra.mxu0 %v758
      %v873 = vpop.f32.mrf.mxu0
      %v874 = vadd.f32 0.0, %v873
      %875 = vmatmul.f32.gmra.mxu0 %v761
      %v876 = vpop.f32.mrf.mxu0
      %v877 = vadd.f32 0.0, %v876
      %878 = vmatmul.f32.gmra.mxu0 %v764
      %v879 = vpop.f32.mrf.mxu0
      %v880 = vadd.f32 0.0, %v879
      %881 = vmatmul.f32.gmra.mxu0 %v767
      %v882 = vpop.f32.mrf.mxu0
      %v883 = vadd.f32 0.0, %v882
      %884 = vmatmul.f32.gmra.mxu0 %v770
      %v885 = vpop.f32.mrf.mxu0
      %v886 = vadd.f32 0.0, %v885
      %887 = vmatmul.f32.gmra.mxu0 %v773
      %v888 = vpop.f32.mrf.mxu0
      %v889 = vadd.f32 0.0, %v888
      %890 = vmatmul.f32.gmra.mxu0 %v776
      %v891 = vpop.f32.mrf.mxu0
      %v892 = vadd.f32 0.0, %v891
      %893 = vmatmul.f32.gmra.mxu0 %v779
      %v894 = vpop.f32.mrf.mxu0
      %v895 = vadd.f32 0.0, %v894
      %896 = vmatmul.f32.gmra.mxu0 %v782
      %v897 = vpop.f32.mrf.mxu0
      %v898 = vadd.f32 0.0, %v897
      %899 = vmatmul.f32.gmra.mxu0 %v785
      %v900 = vpop.f32.mrf.mxu0
      %v901 = vadd.f32 0.0, %v900
      %902 = vmatmul.f32.gmra.mxu0 %v788
      %v903 = vpop.f32.mrf.mxu0
      %v904 = vadd.f32 0.0, %v903
      %905 = vmatmul.f32.gmra.mxu0 %v791
      %v906 = vpop.f32.mrf.mxu0
      %v907 = vadd.f32 0.0, %v906
      %908 = vmatmul.f32.gmra.mxu0 %v794
      %v909 = vpop.f32.mrf.mxu0
      %v910 = vadd.f32 0.0, %v909
      %911 = vmatmul.f32.gmra.mxu0 %v797
      %v912 = vpop.f32.mrf.mxu0
      %v913 = vadd.f32 0.0, %v912
      %914 = vmatmul.f32.gmra.mxu0 %v800
      %v915 = vpop.f32.mrf.mxu0
      %v916 = vadd.f32 0.0, %v915
      %917 = vmatmul.f32.gmra.mxu0 %v803
      %v918 = vpop.f32.mrf.mxu0
      %v919 = vadd.f32 0.0, %v918
      %920 = vmatmul.f32.gmra.mxu0 %v806
      %v921 = vpop.f32.mrf.mxu0
      %v922 = vadd.f32 0.0, %v921
      %923 = vmatmul.f32.gmra.mxu0 %v809
      %v924 = vpop.f32.mrf.mxu0
      %v925 = vadd.f32 0.0, %v924
      %926 = vmatmul.f32.gmra.mxu0 %v812
      %v927 = vpop.f32.mrf.mxu0
      %v928 = vadd.f32 0.0, %v927
      %929 = vmatmul.f32.gmra.mxu0 %v815
      %v930 = vpop.f32.mrf.mxu0
      %v931 = vadd.f32 0.0, %v930
      %932 = vmatmul.f32.gmra.mxu0 %v818
      %v933 = vpop.f32.mrf.mxu0
      %v934 = vadd.f32 0.0, %v933
      %935 = vmatmul.f32.gmra.mxu0 %v821
      %v936 = vpop.f32.mrf.mxu0
      %v937 = vadd.f32 0.0, %v936
      %938 = vmatmul.f32.gmra.mxu0 %v824
      %v939 = vpop.f32.mrf.mxu0
      %v940 = vadd.f32 0.0, %v939
      %941 = vmatmul.f32.gmra.mxu0 %v827
      %v942 = vpop.f32.mrf.mxu0
      %v943 = vadd.f32 0.0, %v942
      %944 = vmatmul.f32.gmra.mxu0 %v830
      %v945 = vpop.f32.mrf.mxu0
      %v946 = vadd.f32 0.0, %v945
      %947 = vmatmul.f32.gmra.mxu0 %v833
      %v948 = vpop.f32.mrf.mxu0
      %v949 = vadd.f32 0.0, %v948
      %950 = vmatmul.f32.gmra.mxu0 %v836
      %v951 = vpop.f32.mrf.mxu0
      %v952 = vadd.f32 0.0, %v951
      %953 = vmatmul.f32.gmra.mxu0 %v839
      %v954 = vpop.f32.mrf.mxu0
      %v955 = vadd.f32 0.0, %v954
      %956 = vmatmul.f32.gmra.mxu0 %v842
      %v957 = vpop.f32.mrf.mxu0
      %v958 = vadd.f32 0.0, %v957
      %959 = vdwg.mxu0
      %v960 = vadd.f32 %v619, %v865
      %v961 = vadd.f32 %v622, %v868
      %v962 = vadd.f32 %v625, %v871
      %v963 = vadd.f32 %v628, %v874
      %v964 = vadd.f32 %v631, %v877
      %v965 = vadd.f32 %v634, %v880
      %v966 = vadd.f32 %v637, %v883
      %v967 = vadd.f32 %v640, %v886
      %v968 = vadd.f32 %v643, %v889
      %v969 = vadd.f32 %v646, %v892
      %v970 = vadd.f32 %v649, %v895
      %v971 = vadd.f32 %v652, %v898
      %v972 = vadd.f32 %v655, %v901
      %v973 = vadd.f32 %v658, %v904
      %v974 = vadd.f32 %v661, %v907
      %v975 = vadd.f32 %v664, %v910
      %v976 = vadd.f32 %v667, %v913
      %v977 = vadd.f32 %v670, %v916
      %v978 = vadd.f32 %v673, %v919
      %v979 = vadd.f32 %v676, %v922
      %v980 = vadd.f32 %v679, %v925
      %v981 = vadd.f32 %v682, %v928
      %v982 = vadd.f32 %v685, %v931
      %v983 = vadd.f32 %v688, %v934
      %v984 = vadd.f32 %v691, %v937
      %v985 = vadd.f32 %v694, %v940
      %v986 = vadd.f32 %v697, %v943
      %v987 = vadd.f32 %v700, %v946
      %v988 = vadd.f32 %v703, %v949
      %v989 = vadd.f32 %v706, %v952
      %v990 = vadd.f32 %v709, %v955
      %v991 = vadd.f32 %v712, %v958
      %s992 = scalar_lea.vmem %s217, 24
      %v993 = vld [vmem:[%s992] sm:$0xff]
      %v994 = vld [vmem:[%s992 + $0x8] sm:$0xff]
      %v995 = vld [vmem:[%s992 + $0x18] sm:$0xff]
      %v996 = vld [vmem:[%s992 + $0x20] sm:$0xff]
      %v997 = vld [vmem:[%s992 + $0x30] sm:$0xff]
      %v998 = vld [vmem:[%s992 + $0x38] sm:$0xff]
      %v999 = vld [vmem:[%s992 + $0x48] sm:$0xff]
      %v1000 = vld [vmem:[%s992 + $0x50] sm:$0xff]
      %v1001 = vld [vmem:[%s992 + $0x60] sm:$0xff]
      %v1002 = vld [vmem:[%s992 + $0x68] sm:$0xff]
      %v1003 = vld [vmem:[%s992 + $0x78] sm:$0xff]
      %v1004 = vld [vmem:[%s992 + $0x80] sm:$0xff]
      %v1005 = vld [vmem:[%s992 + $0x90] sm:$0xff]
      %v1006 = vld [vmem:[%s992 + $0x98] sm:$0xff]
      %v1007 = vld [vmem:[%s992 + $0xa8] sm:$0xff]
      %v1008 = vld [vmem:[%s992 + $0xb0] sm:$0xff]
      %v1009 = vld [vmem:[%s992 + $0xc0] sm:$0xff]
      %v1010 = vld [vmem:[%s992 + $0xc8] sm:$0xff]
      %v1011 = vld [vmem:[%s992 + $0xd8] sm:$0xff]
      %v1012 = vld [vmem:[%s992 + $0xe0] sm:$0xff]
      %v1013 = vld [vmem:[%s992 + $0xf0] sm:$0xff]
      %v1014 = vld [vmem:[%s992 + $0xf8] sm:$0xff]
      %v1015 = vld [vmem:[%s992 + $0x108] sm:$0xff]
      %v1016 = vld [vmem:[%s992 + $0x110] sm:$0xff]
      %v1017 = vld [vmem:[%s992 + $0x120] sm:$0xff]
      %v1018 = vld [vmem:[%s992 + $0x128] sm:$0xff]
      %v1019 = vld [vmem:[%s992 + $0x138] sm:$0xff]
      %v1020 = vld [vmem:[%s992 + $0x140] sm:$0xff]
      %v1021 = vld [vmem:[%s992 + $0x150] sm:$0xff]
      %v1022 = vld [vmem:[%s992 + $0x158] sm:$0xff]
      %v1023 = vld [vmem:[%s992 + $0x168] sm:$0xff]
      %v1024 = vld [vmem:[%s992 + $0x170] sm:$0xff]
      %s1025 = scalar_lea.vmem %s1, 12
      %v1026 = vld [vmem:[%s1025] sm:$0xf]
      %v1028 = vsel %vm288, %v993, 0
      %v1031 = vsel %vm288, %v994, 0
      %v1034 = vsel %vm288, %v995, 0
      %v1037 = vsel %vm288, %v996, 0
      %v1040 = vsel %vm288, %v997, 0
      %v1043 = vsel %vm288, %v998, 0
      %v1046 = vsel %vm288, %v999, 0
      %v1049 = vsel %vm288, %v1000, 0
      %v1052 = vsel %vm288, %v1001, 0
      %v1055 = vsel %vm288, %v1002, 0
      %v1058 = vsel %vm288, %v1003, 0
      %v1061 = vsel %vm288, %v1004, 0
      %v1064 = vsel %vm288, %v1005, 0
      %v1067 = vsel %vm288, %v1006, 0
      %v1070 = vsel %vm288, %v1007, 0
      %v1073 = vsel %vm288, %v1008, 0
      %v1076 = vsel %vm288, %v1009, 0
      %v1079 = vsel %vm288, %v1010, 0
      %v1082 = vsel %vm288, %v1011, 0
      %v1085 = vsel %vm288, %v1012, 0
      %v1088 = vsel %vm288, %v1013, 0
      %v1091 = vsel %vm288, %v1014, 0
      %v1094 = vsel %vm288, %v1015, 0
      %v1097 = vsel %vm288, %v1016, 0
      %v1100 = vsel %vm288, %v1017, 0
      %v1103 = vsel %vm288, %v1018, 0
      %v1106 = vsel %vm288, %v1019, 0
      %v1109 = vsel %vm288, %v1020, 0
      %v1112 = vsel %vm288, %v1021, 0
      %v1115 = vsel %vm288, %v1022, 0
      %v1118 = vsel %vm288, %v1023, 0
      %v1121 = vsel %vm288, %v1024, 0
      %v1124 = vsel %vm385, %v1026, 0
      %1126 = vmatpush.msra.mxu0 0.0
      %1127 = vmatpush.msra.mxu0 0.0
      %1128 = vmatpush.msra.mxu0 0.0
      %1129 = vmatpush.msra.mxu0 0.0
      %1130 = vmatpush.msra.mxu0 0.0
      %1131 = vmatpush.msra.mxu0 0.0
      %1132 = vmatpush.msra.mxu0 0.0
      %1133 = vmatpush.msra.mxu0 0.0
      %1134 = vmatpush.msra.mxu0 0.0
      %1135 = vmatpush.msra.mxu0 0.0
      %1136 = vmatpush.msra.mxu0 0.0
      %1137 = vmatpush.msra.mxu0 0.0
      %1138 = vmatpush.msra.mxu0 0.0
      %1139 = vmatpush.msra.mxu0 0.0
      %1140 = vmatpush.msra.mxu0 0.0
      %1141 = vmatpush.msra.mxu0 %v1124
      %1142 = vmatmul.f32.gmra.mxu0 %v1028
      %v1143 = vpop.f32.mrf.mxu0
      %v1144 = vadd.f32 0.0, %v1143
      %1145 = vmatmul.f32.gmra.mxu0 %v1031
      %v1146 = vpop.f32.mrf.mxu0
      %v1147 = vadd.f32 0.0, %v1146
      %1148 = vmatmul.f32.gmra.mxu0 %v1034
      %v1149 = vpop.f32.mrf.mxu0
      %v1150 = vadd.f32 0.0, %v1149
      %1151 = vmatmul.f32.gmra.mxu0 %v1037
      %v1152 = vpop.f32.mrf.mxu0
      %v1153 = vadd.f32 0.0, %v1152
      %1154 = vmatmul.f32.gmra.mxu0 %v1040
      %v1155 = vpop.f32.mrf.mxu0
      %v1156 = vadd.f32 0.0, %v1155
      %1157 = vmatmul.f32.gmra.mxu0 %v1043
      %v1158 = vpop.f32.mrf.mxu0
      %v1159 = vadd.f32 0.0, %v1158
      %1160 = vmatmul.f32.gmra.mxu0 %v1046
      %v1161 = vpop.f32.mrf.mxu0
      %v1162 = vadd.f32 0.0, %v1161
      %1163 = vmatmul.f32.gmra.mxu0 %v1049
      %v1164 = vpop.f32.mrf.mxu0
      %v1165 = vadd.f32 0.0, %v1164
      %1166 = vmatmul.f32.gmra.mxu0 %v1052
      %v1167 = vpop.f32.mrf.mxu0
      %v1168 = vadd.f32 0.0, %v1167
      %1169 = vmatmul.f32.gmra.mxu0 %v1055
      %v1170 = vpop.f32.mrf.mxu0
      %v1171 = vadd.f32 0.0, %v1170
      %1172 = vmatmul.f32.gmra.mxu0 %v1058
      %v1173 = vpop.f32.mrf.mxu0
      %v1174 = vadd.f32 0.0, %v1173
      %1175 = vmatmul.f32.gmra.mxu0 %v1061
      %v1176 = vpop.f32.mrf.mxu0
      %v1177 = vadd.f32 0.0, %v1176
      %1178 = vmatmul.f32.gmra.mxu0 %v1064
      %v1179 = vpop.f32.mrf.mxu0
      %v1180 = vadd.f32 0.0, %v1179
      %1181 = vmatmul.f32.gmra.mxu0 %v1067
      %v1182 = vpop.f32.mrf.mxu0
      %v1183 = vadd.f32 0.0, %v1182
      %1184 = vmatmul.f32.gmra.mxu0 %v1070
      %v1185 = vpop.f32.mrf.mxu0
      %v1186 = vadd.f32 0.0, %v1185
      %1187 = vmatmul.f32.gmra.mxu0 %v1073
      %v1188 = vpop.f32.mrf.mxu0
      %v1189 = vadd.f32 0.0, %v1188
      %1190 = vmatmul.f32.gmra.mxu0 %v1076
      %v1191 = vpop.f32.mrf.mxu0
      %v1192 = vadd.f32 0.0, %v1191
      %1193 = vmatmul.f32.gmra.mxu0 %v1079
      %v1194 = vpop.f32.mrf.mxu0
      %v1195 = vadd.f32 0.0, %v1194
      %1196 = vmatmul.f32.gmra.mxu0 %v1082
      %v1197 = vpop.f32.mrf.mxu0
      %v1198 = vadd.f32 0.0, %v1197
      %1199 = vmatmul.f32.gmra.mxu0 %v1085
      %v1200 = vpop.f32.mrf.mxu0
      %v1201 = vadd.f32 0.0, %v1200
      %1202 = vmatmul.f32.gmra.mxu0 %v1088
      %v1203 = vpop.f32.mrf.mxu0
      %v1204 = vadd.f32 0.0, %v1203
      %1205 = vmatmul.f32.gmra.mxu0 %v1091
      %v1206 = vpop.f32.mrf.mxu0
      %v1207 = vadd.f32 0.0, %v1206
      %1208 = vmatmul.f32.gmra.mxu0 %v1094
      %v1209 = vpop.f32.mrf.mxu0
      %v1210 = vadd.f32 0.0, %v1209
      %1211 = vmatmul.f32.gmra.mxu0 %v1097
      %v1212 = vpop.f32.mrf.mxu0
      %v1213 = vadd.f32 0.0, %v1212
      %1214 = vmatmul.f32.gmra.mxu0 %v1100
      %v1215 = vpop.f32.mrf.mxu0
      %v1216 = vadd.f32 0.0, %v1215
      %1217 = vmatmul.f32.gmra.mxu0 %v1103
      %v1218 = vpop.f32.mrf.mxu0
      %v1219 = vadd.f32 0.0, %v1218
      %1220 = vmatmul.f32.gmra.mxu0 %v1106
      %v1221 = vpop.f32.mrf.mxu0
      %v1222 = vadd.f32 0.0, %v1221
      %1223 = vmatmul.f32.gmra.mxu0 %v1109
      %v1224 = vpop.f32.mrf.mxu0
      %v1225 = vadd.f32 0.0, %v1224
      %1226 = vmatmul.f32.gmra.mxu0 %v1112
      %v1227 = vpop.f32.mrf.mxu0
      %v1228 = vadd.f32 0.0, %v1227
      %1229 = vmatmul.f32.gmra.mxu0 %v1115
      %v1230 = vpop.f32.mrf.mxu0
      %v1231 = vadd.f32 0.0, %v1230
      %1232 = vmatmul.f32.gmra.mxu0 %v1118
      %v1233 = vpop.f32.mrf.mxu0
      %v1234 = vadd.f32 0.0, %v1233
      %1235 = vmatmul.f32.gmra.mxu0 %v1121
      %v1236 = vpop.f32.mrf.mxu0
      %v1237 = vadd.f32 0.0, %v1236
      %1238 = vdwg.mxu0
      %v1239 = vadd.f32 %v960, %v1144
      %v1240 = vadd.f32 %v961, %v1147
      %v1241 = vadd.f32 %v962, %v1150
      %v1242 = vadd.f32 %v963, %v1153
      %v1243 = vadd.f32 %v964, %v1156
      %v1244 = vadd.f32 %v965, %v1159
      %v1245 = vadd.f32 %v966, %v1162
      %v1246 = vadd.f32 %v967, %v1165
      %v1247 = vadd.f32 %v968, %v1168
      %v1248 = vadd.f32 %v969, %v1171
      %v1249 = vadd.f32 %v970, %v1174
      %v1250 = vadd.f32 %v971, %v1177
      %v1251 = vadd.f32 %v972, %v1180
      %v1252 = vadd.f32 %v973, %v1183
      %v1253 = vadd.f32 %v974, %v1186
      %v1254 = vadd.f32 %v975, %v1189
      %v1255 = vadd.f32 %v976, %v1192
      %v1256 = vadd.f32 %v977, %v1195
      %v1257 = vadd.f32 %v978, %v1198
      %v1258 = vadd.f32 %v979, %v1201
      %v1259 = vadd.f32 %v980, %v1204
      %v1260 = vadd.f32 %v981, %v1207
      %v1261 = vadd.f32 %v982, %v1210
      %v1262 = vadd.f32 %v983, %v1213
      %v1263 = vadd.f32 %v984, %v1216
      %v1264 = vadd.f32 %v985, %v1219
      %v1265 = vadd.f32 %v986, %v1222
      %v1266 = vadd.f32 %v987, %v1225
      %v1267 = vadd.f32 %v988, %v1228
      %v1268 = vadd.f32 %v989, %v1231
      %v1269 = vadd.f32 %v990, %v1234
      %v1270 = vadd.f32 %v991, %v1237
      %v1271 = vld [vmem:[%s992 + $0x1] sm:$0xff]
      %v1272 = vld [vmem:[%s992 + $0x9] sm:$0xff]
      %v1273 = vld [vmem:[%s992 + $0x19] sm:$0xff]
      %v1274 = vld [vmem:[%s992 + $0x21] sm:$0xff]
      %v1275 = vld [vmem:[%s992 + $0x31] sm:$0xff]
      %v1276 = vld [vmem:[%s992 + $0x39] sm:$0xff]
      %v1277 = vld [vmem:[%s992 + $0x49] sm:$0xff]
      %v1278 = vld [vmem:[%s992 + $0x51] sm:$0xff]
      %v1279 = vld [vmem:[%s992 + $0x61] sm:$0xff]
      %v1280 = vld [vmem:[%s992 + $0x69] sm:$0xff]
      %v1281 = vld [vmem:[%s992 + $0x79] sm:$0xff]
      %v1282 = vld [vmem:[%s992 + $0x81] sm:$0xff]
      %v1283 = vld [vmem:[%s992 + $0x91] sm:$0xff]
      %v1284 = vld [vmem:[%s992 + $0x99] sm:$0xff]
      %v1285 = vld [vmem:[%s992 + $0xa9] sm:$0xff]
      %v1286 = vld [vmem:[%s992 + $0xb1] sm:$0xff]
      %v1287 = vld [vmem:[%s992 + $0xc1] sm:$0xff]
      %v1288 = vld [vmem:[%s992 + $0xc9] sm:$0xff]
      %v1289 = vld [vmem:[%s992 + $0xd9] sm:$0xff]
      %v1290 = vld [vmem:[%s992 + $0xe1] sm:$0xff]
      %v1291 = vld [vmem:[%s992 + $0xf1] sm:$0xff]
      %v1292 = vld [vmem:[%s992 + $0xf9] sm:$0xff]
      %v1293 = vld [vmem:[%s992 + $0x109] sm:$0xff]
      %v1294 = vld [vmem:[%s992 + $0x111] sm:$0xff]
      %v1295 = vld [vmem:[%s992 + $0x121] sm:$0xff]
      %v1296 = vld [vmem:[%s992 + $0x129] sm:$0xff]
      %v1297 = vld [vmem:[%s992 + $0x139] sm:$0xff]
      %v1298 = vld [vmem:[%s992 + $0x141] sm:$0xff]
      %v1299 = vld [vmem:[%s992 + $0x151] sm:$0xff]
      %v1300 = vld [vmem:[%s992 + $0x159] sm:$0xff]
      %v1301 = vld [vmem:[%s992 + $0x169] sm:$0xff]
      %v1302 = vld [vmem:[%s992 + $0x171] sm:$0xff]
      %s1303 = scalar_lea.vmem %s1, 16
      %v1304 = vld [vmem:[%s1303] sm:$0xf]
      %v1306 = vsel %vm288, %v1271, 0
      %v1309 = vsel %vm288, %v1272, 0
      %v1312 = vsel %vm288, %v1273, 0
      %v1315 = vsel %vm288, %v1274, 0
      %v1318 = vsel %vm288, %v1275, 0
      %v1321 = vsel %vm288, %v1276, 0
      %v1324 = vsel %vm288, %v1277, 0
      %v1327 = vsel %vm288, %v1278, 0
      %v1330 = vsel %vm288, %v1279, 0
      %v1333 = vsel %vm288, %v1280, 0
      %v1336 = vsel %vm288, %v1281, 0
      %v1339 = vsel %vm288, %v1282, 0
      %v1342 = vsel %vm288, %v1283, 0
      %v1345 = vsel %vm288, %v1284, 0
      %v1348 = vsel %vm288, %v1285, 0
      %v1351 = vsel %vm288, %v1286, 0
      %v1354 = vsel %vm288, %v1287, 0
      %v1357 = vsel %vm288, %v1288, 0
      %v1360 = vsel %vm288, %v1289, 0
      %v1363 = vsel %vm288, %v1290, 0
      %v1366 = vsel %vm288, %v1291, 0
      %v1369 = vsel %vm288, %v1292, 0
      %v1372 = vsel %vm288, %v1293, 0
      %v1375 = vsel %vm288, %v1294, 0
      %v1378 = vsel %vm288, %v1295, 0
      %v1381 = vsel %vm288, %v1296, 0
      %v1384 = vsel %vm288, %v1297, 0
      %v1387 = vsel %vm288, %v1298, 0
      %v1390 = vsel %vm288, %v1299, 0
      %v1393 = vsel %vm288, %v1300, 0
      %v1396 = vsel %vm288, %v1301, 0
      %v1399 = vsel %vm288, %v1302, 0
      %v1402 = vsel %vm385, %v1304, 0
      %1404 = vmatpush.msra.mxu0 0.0
      %1405 = vmatpush.msra.mxu0 0.0
      %1406 = vmatpush.msra.mxu0 0.0
      %1407 = vmatpush.msra.mxu0 0.0
      %1408 = vmatpush.msra.mxu0 0.0
      %1409 = vmatpush.msra.mxu0 0.0
      %1410 = vmatpush.msra.mxu0 0.0
      %1411 = vmatpush.msra.mxu0 0.0
      %1412 = vmatpush.msra.mxu0 0.0
      %1413 = vmatpush.msra.mxu0 0.0
      %1414 = vmatpush.msra.mxu0 0.0
      %1415 = vmatpush.msra.mxu0 0.0
      %1416 = vmatpush.msra.mxu0 0.0
      %1417 = vmatpush.msra.mxu0 0.0
      %1418 = vmatpush.msra.mxu0 0.0
      %1419 = vmatpush.msra.mxu0 %v1402
      %1420 = vmatmul.f32.gmra.mxu0 %v1306
      %v1421 = vpop.f32.mrf.mxu0
      %v1422 = vadd.f32 0.0, %v1421
      %1423 = vmatmul.f32.gmra.mxu0 %v1309
      %v1424 = vpop.f32.mrf.mxu0
      %v1425 = vadd.f32 0.0, %v1424
      %1426 = vmatmul.f32.gmra.mxu0 %v1312
      %v1427 = vpop.f32.mrf.mxu0
      %v1428 = vadd.f32 0.0, %v1427
      %1429 = vmatmul.f32.gmra.mxu0 %v1315
      %v1430 = vpop.f32.mrf.mxu0
      %v1431 = vadd.f32 0.0, %v1430
      %1432 = vmatmul.f32.gmra.mxu0 %v1318
      %v1433 = vpop.f32.mrf.mxu0
      %v1434 = vadd.f32 0.0, %v1433
      %1435 = vmatmul.f32.gmra.mxu0 %v1321
      %v1436 = vpop.f32.mrf.mxu0
      %v1437 = vadd.f32 0.0, %v1436
      %1438 = vmatmul.f32.gmra.mxu0 %v1324
      %v1439 = vpop.f32.mrf.mxu0
      %v1440 = vadd.f32 0.0, %v1439
      %1441 = vmatmul.f32.gmra.mxu0 %v1327
      %v1442 = vpop.f32.mrf.mxu0
      %v1443 = vadd.f32 0.0, %v1442
      %1444 = vmatmul.f32.gmra.mxu0 %v1330
      %v1445 = vpop.f32.mrf.mxu0
      %v1446 = vadd.f32 0.0, %v1445
      %1447 = vmatmul.f32.gmra.mxu0 %v1333
      %v1448 = vpop.f32.mrf.mxu0
      %v1449 = vadd.f32 0.0, %v1448
      %1450 = vmatmul.f32.gmra.mxu0 %v1336
      %v1451 = vpop.f32.mrf.mxu0
      %v1452 = vadd.f32 0.0, %v1451
      %1453 = vmatmul.f32.gmra.mxu0 %v1339
      %v1454 = vpop.f32.mrf.mxu0
      %v1455 = vadd.f32 0.0, %v1454
      %1456 = vmatmul.f32.gmra.mxu0 %v1342
      %v1457 = vpop.f32.mrf.mxu0
      %v1458 = vadd.f32 0.0, %v1457
      %1459 = vmatmul.f32.gmra.mxu0 %v1345
      %v1460 = vpop.f32.mrf.mxu0
      %v1461 = vadd.f32 0.0, %v1460
      %1462 = vmatmul.f32.gmra.mxu0 %v1348
      %v1463 = vpop.f32.mrf.mxu0
      %v1464 = vadd.f32 0.0, %v1463
      %1465 = vmatmul.f32.gmra.mxu0 %v1351
      %v1466 = vpop.f32.mrf.mxu0
      %v1467 = vadd.f32 0.0, %v1466
      %1468 = vmatmul.f32.gmra.mxu0 %v1354
      %v1469 = vpop.f32.mrf.mxu0
      %v1470 = vadd.f32 0.0, %v1469
      %1471 = vmatmul.f32.gmra.mxu0 %v1357
      %v1472 = vpop.f32.mrf.mxu0
      %v1473 = vadd.f32 0.0, %v1472
      %1474 = vmatmul.f32.gmra.mxu0 %v1360
      %v1475 = vpop.f32.mrf.mxu0
      %v1476 = vadd.f32 0.0, %v1475
      %1477 = vmatmul.f32.gmra.mxu0 %v1363
      %v1478 = vpop.f32.mrf.mxu0
      %v1479 = vadd.f32 0.0, %v1478
      %1480 = vmatmul.f32.gmra.mxu0 %v1366
      %v1481 = vpop.f32.mrf.mxu0
      %v1482 = vadd.f32 0.0, %v1481
      %1483 = vmatmul.f32.gmra.mxu0 %v1369
      %v1484 = vpop.f32.mrf.mxu0
      %v1485 = vadd.f32 0.0, %v1484
      %1486 = vmatmul.f32.gmra.mxu0 %v1372
      %v1487 = vpop.f32.mrf.mxu0
      %v1488 = vadd.f32 0.0, %v1487
      %1489 = vmatmul.f32.gmra.mxu0 %v1375
      %v1490 = vpop.f32.mrf.mxu0
      %v1491 = vadd.f32 0.0, %v1490
      %1492 = vmatmul.f32.gmra.mxu0 %v1378
      %v1493 = vpop.f32.mrf.mxu0
      %v1494 = vadd.f32 0.0, %v1493
      %1495 = vmatmul.f32.gmra.mxu0 %v1381
      %v1496 = vpop.f32.mrf.mxu0
      %v1497 = vadd.f32 0.0, %v1496
      %1498 = vmatmul.f32.gmra.mxu0 %v1384
      %v1499 = vpop.f32.mrf.mxu0
      %v1500 = vadd.f32 0.0, %v1499
      %1501 = vmatmul.f32.gmra.mxu0 %v1387
      %v1502 = vpop.f32.mrf.mxu0
      %v1503 = vadd.f32 0.0, %v1502
      %1504 = vmatmul.f32.gmra.mxu0 %v1390
      %v1505 = vpop.f32.mrf.mxu0
      %v1506 = vadd.f32 0.0, %v1505
      %1507 = vmatmul.f32.gmra.mxu0 %v1393
      %v1508 = vpop.f32.mrf.mxu0
      %v1509 = vadd.f32 0.0, %v1508
      %1510 = vmatmul.f32.gmra.mxu0 %v1396
      %v1511 = vpop.f32.mrf.mxu0
      %v1512 = vadd.f32 0.0, %v1511
      %1513 = vmatmul.f32.gmra.mxu0 %v1399
      %v1514 = vpop.f32.mrf.mxu0
      %v1515 = vadd.f32 0.0, %v1514
      %1516 = vdwg.mxu0
      %v1517 = vadd.f32 %v1239, %v1422
      %v1518 = vadd.f32 %v1240, %v1425
      %v1519 = vadd.f32 %v1241, %v1428
      %v1520 = vadd.f32 %v1242, %v1431
      %v1521 = vadd.f32 %v1243, %v1434
      %v1522 = vadd.f32 %v1244, %v1437
      %v1523 = vadd.f32 %v1245, %v1440
      %v1524 = vadd.f32 %v1246, %v1443
      %v1525 = vadd.f32 %v1247, %v1446
      %v1526 = vadd.f32 %v1248, %v1449
      %v1527 = vadd.f32 %v1249, %v1452
      %v1528 = vadd.f32 %v1250, %v1455
      %v1529 = vadd.f32 %v1251, %v1458
      %v1530 = vadd.f32 %v1252, %v1461
      %v1531 = vadd.f32 %v1253, %v1464
      %v1532 = vadd.f32 %v1254, %v1467
      %v1533 = vadd.f32 %v1255, %v1470
      %v1534 = vadd.f32 %v1256, %v1473
      %v1535 = vadd.f32 %v1257, %v1476
      %v1536 = vadd.f32 %v1258, %v1479
      %v1537 = vadd.f32 %v1259, %v1482
      %v1538 = vadd.f32 %v1260, %v1485
      %v1539 = vadd.f32 %v1261, %v1488
      %v1540 = vadd.f32 %v1262, %v1491
      %v1541 = vadd.f32 %v1263, %v1494
      %v1542 = vadd.f32 %v1264, %v1497
      %v1543 = vadd.f32 %v1265, %v1500
      %v1544 = vadd.f32 %v1266, %v1503
      %v1545 = vadd.f32 %v1267, %v1506
      %v1546 = vadd.f32 %v1268, %v1509
      %v1547 = vadd.f32 %v1269, %v1512
      %v1548 = vadd.f32 %v1270, %v1515
      %v1549 = vld [vmem:[%s992 + $0x2] sm:$0xff]
      %v1550 = vld [vmem:[%s992 + $0xa] sm:$0xff]
      %v1551 = vld [vmem:[%s992 + $0x1a] sm:$0xff]
      %v1552 = vld [vmem:[%s992 + $0x22] sm:$0xff]
      %v1553 = vld [vmem:[%s992 + $0x32] sm:$0xff]
      %v1554 = vld [vmem:[%s992 + $0x3a] sm:$0xff]
      %v1555 = vld [vmem:[%s992 + $0x4a] sm:$0xff]
      %v1556 = vld [vmem:[%s992 + $0x52] sm:$0xff]
      %v1557 = vld [vmem:[%s992 + $0x62] sm:$0xff]
      %v1558 = vld [vmem:[%s992 + $0x6a] sm:$0xff]
      %v1559 = vld [vmem:[%s992 + $0x7a] sm:$0xff]
      %v1560 = vld [vmem:[%s992 + $0x82] sm:$0xff]
      %v1561 = vld [vmem:[%s992 + $0x92] sm:$0xff]
      %v1562 = vld [vmem:[%s992 + $0x9a] sm:$0xff]
      %v1563 = vld [vmem:[%s992 + $0xaa] sm:$0xff]
      %v1564 = vld [vmem:[%s992 + $0xb2] sm:$0xff]
      %v1565 = vld [vmem:[%s992 + $0xc2] sm:$0xff]
      %v1566 = vld [vmem:[%s992 + $0xca] sm:$0xff]
      %v1567 = vld [vmem:[%s992 + $0xda] sm:$0xff]
      %v1568 = vld [vmem:[%s992 + $0xe2] sm:$0xff]
      %v1569 = vld [vmem:[%s992 + $0xf2] sm:$0xff]
      %v1570 = vld [vmem:[%s992 + $0xfa] sm:$0xff]
      %v1571 = vld [vmem:[%s992 + $0x10a] sm:$0xff]
      %v1572 = vld [vmem:[%s992 + $0x112] sm:$0xff]
      %v1573 = vld [vmem:[%s992 + $0x122] sm:$0xff]
      %v1574 = vld [vmem:[%s992 + $0x12a] sm:$0xff]
      %v1575 = vld [vmem:[%s992 + $0x13a] sm:$0xff]
      %v1576 = vld [vmem:[%s992 + $0x142] sm:$0xff]
      %v1577 = vld [vmem:[%s992 + $0x152] sm:$0xff]
      %v1578 = vld [vmem:[%s992 + $0x15a] sm:$0xff]
      %v1579 = vld [vmem:[%s992 + $0x16a] sm:$0xff]
      %v1580 = vld [vmem:[%s992 + $0x172] sm:$0xff]
      %s1581 = scalar_lea.vmem %s1, 20
      %v1582 = vld [vmem:[%s1581] sm:$0xf]
      %v1584 = vsel %vm288, %v1549, 0
      %v1587 = vsel %vm288, %v1550, 0
      %v1590 = vsel %vm288, %v1551, 0
      %v1593 = vsel %vm288, %v1552, 0
      %v1596 = vsel %vm288, %v1553, 0
      %v1599 = vsel %vm288, %v1554, 0
      %v1602 = vsel %vm288, %v1555, 0
      %v1605 = vsel %vm288, %v1556, 0
      %v1608 = vsel %vm288, %v1557, 0
      %v1611 = vsel %vm288, %v1558, 0
      %v1614 = vsel %vm288, %v1559, 0
      %v1617 = vsel %vm288, %v1560, 0
      %v1620 = vsel %vm288, %v1561, 0
      %v1623 = vsel %vm288, %v1562, 0
      %v1626 = vsel %vm288, %v1563, 0
      %v1629 = vsel %vm288, %v1564, 0
      %v1632 = vsel %vm288, %v1565, 0
      %v1635 = vsel %vm288, %v1566, 0
      %v1638 = vsel %vm288, %v1567, 0
      %v1641 = vsel %vm288, %v1568, 0
      %v1644 = vsel %vm288, %v1569, 0
      %v1647 = vsel %vm288, %v1570, 0
      %v1650 = vsel %vm288, %v1571, 0
      %v1653 = vsel %vm288, %v1572, 0
      %v1656 = vsel %vm288, %v1573, 0
      %v1659 = vsel %vm288, %v1574, 0
      %v1662 = vsel %vm288, %v1575, 0
      %v1665 = vsel %vm288, %v1576, 0
      %v1668 = vsel %vm288, %v1577, 0
      %v1671 = vsel %vm288, %v1578, 0
      %v1674 = vsel %vm288, %v1579, 0
      %v1677 = vsel %vm288, %v1580, 0
      %v1680 = vsel %vm385, %v1582, 0
      %1682 = vmatpush.msra.mxu0 0.0
      %1683 = vmatpush.msra.mxu0 0.0
      %1684 = vmatpush.msra.mxu0 0.0
      %1685 = vmatpush.msra.mxu0 0.0
      %1686 = vmatpush.msra.mxu0 0.0
      %1687 = vmatpush.msra.mxu0 0.0
      %1688 = vmatpush.msra.mxu0 0.0
      %1689 = vmatpush.msra.mxu0 0.0
      %1690 = vmatpush.msra.mxu0 0.0
      %1691 = vmatpush.msra.mxu0 0.0
      %1692 = vmatpush.msra.mxu0 0.0
      %1693 = vmatpush.msra.mxu0 0.0
      %1694 = vmatpush.msra.mxu0 0.0
      %1695 = vmatpush.msra.mxu0 0.0
      %1696 = vmatpush.msra.mxu0 0.0
      %1697 = vmatpush.msra.mxu0 %v1680
      %1698 = vmatmul.f32.gmra.mxu0 %v1584
      %v1699 = vpop.f32.mrf.mxu0
      %v1700 = vadd.f32 0.0, %v1699
      %1701 = vmatmul.f32.gmra.mxu0 %v1587
      %v1702 = vpop.f32.mrf.mxu0
      %v1703 = vadd.f32 0.0, %v1702
      %1704 = vmatmul.f32.gmra.mxu0 %v1590
      %v1705 = vpop.f32.mrf.mxu0
      %v1706 = vadd.f32 0.0, %v1705
      %1707 = vmatmul.f32.gmra.mxu0 %v1593
      %v1708 = vpop.f32.mrf.mxu0
      %v1709 = vadd.f32 0.0, %v1708
      %1710 = vmatmul.f32.gmra.mxu0 %v1596
      %v1711 = vpop.f32.mrf.mxu0
      %v1712 = vadd.f32 0.0, %v1711
      %1713 = vmatmul.f32.gmra.mxu0 %v1599
      %v1714 = vpop.f32.mrf.mxu0
      %v1715 = vadd.f32 0.0, %v1714
      %1716 = vmatmul.f32.gmra.mxu0 %v1602
      %v1717 = vpop.f32.mrf.mxu0
      %v1718 = vadd.f32 0.0, %v1717
      %1719 = vmatmul.f32.gmra.mxu0 %v1605
      %v1720 = vpop.f32.mrf.mxu0
      %v1721 = vadd.f32 0.0, %v1720
      %1722 = vmatmul.f32.gmra.mxu0 %v1608
      %v1723 = vpop.f32.mrf.mxu0
      %v1724 = vadd.f32 0.0, %v1723
      %1725 = vmatmul.f32.gmra.mxu0 %v1611
      %v1726 = vpop.f32.mrf.mxu0
      %v1727 = vadd.f32 0.0, %v1726
      %1728 = vmatmul.f32.gmra.mxu0 %v1614
      %v1729 = vpop.f32.mrf.mxu0
      %v1730 = vadd.f32 0.0, %v1729
      %1731 = vmatmul.f32.gmra.mxu0 %v1617
      %v1732 = vpop.f32.mrf.mxu0
      %v1733 = vadd.f32 0.0, %v1732
      %1734 = vmatmul.f32.gmra.mxu0 %v1620
      %v1735 = vpop.f32.mrf.mxu0
      %v1736 = vadd.f32 0.0, %v1735
      %1737 = vmatmul.f32.gmra.mxu0 %v1623
      %v1738 = vpop.f32.mrf.mxu0
      %v1739 = vadd.f32 0.0, %v1738
      %1740 = vmatmul.f32.gmra.mxu0 %v1626
      %v1741 = vpop.f32.mrf.mxu0
      %v1742 = vadd.f32 0.0, %v1741
      %1743 = vmatmul.f32.gmra.mxu0 %v1629
      %v1744 = vpop.f32.mrf.mxu0
      %v1745 = vadd.f32 0.0, %v1744
      %1746 = vmatmul.f32.gmra.mxu0 %v1632
      %v1747 = vpop.f32.mrf.mxu0
      %v1748 = vadd.f32 0.0, %v1747
      %1749 = vmatmul.f32.gmra.mxu0 %v1635
      %v1750 = vpop.f32.mrf.mxu0
      %v1751 = vadd.f32 0.0, %v1750
      %1752 = vmatmul.f32.gmra.mxu0 %v1638
      %v1753 = vpop.f32.mrf.mxu0
      %v1754 = vadd.f32 0.0, %v1753
      %1755 = vmatmul.f32.gmra.mxu0 %v1641
      %v1756 = vpop.f32.mrf.mxu0
      %v1757 = vadd.f32 0.0, %v1756
      %1758 = vmatmul.f32.gmra.mxu0 %v1644
      %v1759 = vpop.f32.mrf.mxu0
      %v1760 = vadd.f32 0.0, %v1759
      %1761 = vmatmul.f32.gmra.mxu0 %v1647
      %v1762 = vpop.f32.mrf.mxu0
      %v1763 = vadd.f32 0.0, %v1762
      %1764 = vmatmul.f32.gmra.mxu0 %v1650
      %v1765 = vpop.f32.mrf.mxu0
      %v1766 = vadd.f32 0.0, %v1765
      %1767 = vmatmul.f32.gmra.mxu0 %v1653
      %v1768 = vpop.f32.mrf.mxu0
      %v1769 = vadd.f32 0.0, %v1768
      %1770 = vmatmul.f32.gmra.mxu0 %v1656
      %v1771 = vpop.f32.mrf.mxu0
      %v1772 = vadd.f32 0.0, %v1771
      %1773 = vmatmul.f32.gmra.mxu0 %v1659
      %v1774 = vpop.f32.mrf.mxu0
      %v1775 = vadd.f32 0.0, %v1774
      %1776 = vmatmul.f32.gmra.mxu0 %v1662
      %v1777 = vpop.f32.mrf.mxu0
      %v1778 = vadd.f32 0.0, %v1777
      %1779 = vmatmul.f32.gmra.mxu0 %v1665
      %v1780 = vpop.f32.mrf.mxu0
      %v1781 = vadd.f32 0.0, %v1780
      %1782 = vmatmul.f32.gmra.mxu0 %v1668
      %v1783 = vpop.f32.mrf.mxu0
      %v1784 = vadd.f32 0.0, %v1783
      %1785 = vmatmul.f32.gmra.mxu0 %v1671
      %v1786 = vpop.f32.mrf.mxu0
      %v1787 = vadd.f32 0.0, %v1786
      %1788 = vmatmul.f32.gmra.mxu0 %v1674
      %v1789 = vpop.f32.mrf.mxu0
      %v1790 = vadd.f32 0.0, %v1789
      %1791 = vmatmul.f32.gmra.mxu0 %v1677
      %v1792 = vpop.f32.mrf.mxu0
      %v1793 = vadd.f32 0.0, %v1792
      %1794 = vdwg.mxu0
      %v1795 = vadd.f32 %v1517, %v1700
      %v1796 = vadd.f32 %v1518, %v1703
      %v1797 = vadd.f32 %v1519, %v1706
      %v1798 = vadd.f32 %v1520, %v1709
      %v1799 = vadd.f32 %v1521, %v1712
      %v1800 = vadd.f32 %v1522, %v1715
      %v1801 = vadd.f32 %v1523, %v1718
      %v1802 = vadd.f32 %v1524, %v1721
      %v1803 = vadd.f32 %v1525, %v1724
      %v1804 = vadd.f32 %v1526, %v1727
      %v1805 = vadd.f32 %v1527, %v1730
      %v1806 = vadd.f32 %v1528, %v1733
      %v1807 = vadd.f32 %v1529, %v1736
      %v1808 = vadd.f32 %v1530, %v1739
      %v1809 = vadd.f32 %v1531, %v1742
      %v1810 = vadd.f32 %v1532, %v1745
      %v1811 = vadd.f32 %v1533, %v1748
      %v1812 = vadd.f32 %v1534, %v1751
      %v1813 = vadd.f32 %v1535, %v1754
      %v1814 = vadd.f32 %v1536, %v1757
      %v1815 = vadd.f32 %v1537, %v1760
      %v1816 = vadd.f32 %v1538, %v1763
      %v1817 = vadd.f32 %v1539, %v1766
      %v1818 = vadd.f32 %v1540, %v1769
      %v1819 = vadd.f32 %v1541, %v1772
      %v1820 = vadd.f32 %v1542, %v1775
      %v1821 = vadd.f32 %v1543, %v1778
      %v1822 = vadd.f32 %v1544, %v1781
      %v1823 = vadd.f32 %v1545, %v1784
      %v1824 = vadd.f32 %v1546, %v1787
      %v1825 = vadd.f32 %v1547, %v1790
      %v1826 = vadd.f32 %v1548, %v1793
      %s1827 = scalar_lea.vmem %s217, 48
      %v1828 = vld [vmem:[%s1827] sm:$0xff]
      %v1829 = vld [vmem:[%s1827 + $0x8] sm:$0xff]
      %v1830 = vld [vmem:[%s1827 + $0x18] sm:$0xff]
      %v1831 = vld [vmem:[%s1827 + $0x20] sm:$0xff]
      %v1832 = vld [vmem:[%s1827 + $0x30] sm:$0xff]
      %v1833 = vld [vmem:[%s1827 + $0x38] sm:$0xff]
      %v1834 = vld [vmem:[%s1827 + $0x48] sm:$0xff]
      %v1835 = vld [vmem:[%s1827 + $0x50] sm:$0xff]
      %v1836 = vld [vmem:[%s1827 + $0x60] sm:$0xff]
      %v1837 = vld [vmem:[%s1827 + $0x68] sm:$0xff]
      %v1838 = vld [vmem:[%s1827 + $0x78] sm:$0xff]
      %v1839 = vld [vmem:[%s1827 + $0x80] sm:$0xff]
      %v1840 = vld [vmem:[%s1827 + $0x90] sm:$0xff]
      %v1841 = vld [vmem:[%s1827 + $0x98] sm:$0xff]
      %v1842 = vld [vmem:[%s1827 + $0xa8] sm:$0xff]
      %v1843 = vld [vmem:[%s1827 + $0xb0] sm:$0xff]
      %v1844 = vld [vmem:[%s1827 + $0xc0] sm:$0xff]
      %v1845 = vld [vmem:[%s1827 + $0xc8] sm:$0xff]
      %v1846 = vld [vmem:[%s1827 + $0xd8] sm:$0xff]
      %v1847 = vld [vmem:[%s1827 + $0xe0] sm:$0xff]
      %v1848 = vld [vmem:[%s1827 + $0xf0] sm:$0xff]
      %v1849 = vld [vmem:[%s1827 + $0xf8] sm:$0xff]
      %v1850 = vld [vmem:[%s1827 + $0x108] sm:$0xff]
      %v1851 = vld [vmem:[%s1827 + $0x110] sm:$0xff]
      %v1852 = vld [vmem:[%s1827 + $0x120] sm:$0xff]
      %v1853 = vld [vmem:[%s1827 + $0x128] sm:$0xff]
      %v1854 = vld [vmem:[%s1827 + $0x138] sm:$0xff]
      %v1855 = vld [vmem:[%s1827 + $0x140] sm:$0xff]
      %v1856 = vld [vmem:[%s1827 + $0x150] sm:$0xff]
      %v1857 = vld [vmem:[%s1827 + $0x158] sm:$0xff]
      %v1858 = vld [vmem:[%s1827 + $0x168] sm:$0xff]
      %v1859 = vld [vmem:[%s1827 + $0x170] sm:$0xff]
      %s1860 = scalar_lea.vmem %s1, 24
      %v1861 = vld [vmem:[%s1860] sm:$0xf]
      %v1863 = vsel %vm288, %v1828, 0
      %v1866 = vsel %vm288, %v1829, 0
      %v1869 = vsel %vm288, %v1830, 0
      %v1872 = vsel %vm288, %v1831, 0
      %v1875 = vsel %vm288, %v1832, 0
      %v1878 = vsel %vm288, %v1833, 0
      %v1881 = vsel %vm288, %v1834, 0
      %v1884 = vsel %vm288, %v1835, 0
      %v1887 = vsel %vm288, %v1836, 0
      %v1890 = vsel %vm288, %v1837, 0
      %v1893 = vsel %vm288, %v1838, 0
      %v1896 = vsel %vm288, %v1839, 0
      %v1899 = vsel %vm288, %v1840, 0
      %v1902 = vsel %vm288, %v1841, 0
      %v1905 = vsel %vm288, %v1842, 0
      %v1908 = vsel %vm288, %v1843, 0
      %v1911 = vsel %vm288, %v1844, 0
      %v1914 = vsel %vm288, %v1845, 0
      %v1917 = vsel %vm288, %v1846, 0
      %v1920 = vsel %vm288, %v1847, 0
      %v1923 = vsel %vm288, %v1848, 0
      %v1926 = vsel %vm288, %v1849, 0
      %v1929 = vsel %vm288, %v1850, 0
      %v1932 = vsel %vm288, %v1851, 0
      %v1935 = vsel %vm288, %v1852, 0
      %v1938 = vsel %vm288, %v1853, 0
      %v1941 = vsel %vm288, %v1854, 0
      %v1944 = vsel %vm288, %v1855, 0
      %v1947 = vsel %vm288, %v1856, 0
      %v1950 = vsel %vm288, %v1857, 0
      %v1953 = vsel %vm288, %v1858, 0
      %v1956 = vsel %vm288, %v1859, 0
      %v1959 = vsel %vm385, %v1861, 0
      %1961 = vmatpush.msra.mxu0 0.0
      %1962 = vmatpush.msra.mxu0 0.0
      %1963 = vmatpush.msra.mxu0 0.0
      %1964 = vmatpush.msra.mxu0 0.0
      %1965 = vmatpush.msra.mxu0 0.0
      %1966 = vmatpush.msra.mxu0 0.0
      %1967 = vmatpush.msra.mxu0 0.0
      %1968 = vmatpush.msra.mxu0 0.0
      %1969 = vmatpush.msra.mxu0 0.0
      %1970 = vmatpush.msra.mxu0 0.0
      %1971 = vmatpush.msra.mxu0 0.0
      %1972 = vmatpush.msra.mxu0 0.0
      %1973 = vmatpush.msra.mxu0 0.0
      %1974 = vmatpush.msra.mxu0 0.0
      %1975 = vmatpush.msra.mxu0 0.0
      %1976 = vmatpush.msra.mxu0 %v1959
      %1977 = vmatmul.f32.gmra.mxu0 %v1863
      %v1978 = vpop.f32.mrf.mxu0
      %v1979 = vadd.f32 0.0, %v1978
      %1980 = vmatmul.f32.gmra.mxu0 %v1866
      %v1981 = vpop.f32.mrf.mxu0
      %v1982 = vadd.f32 0.0, %v1981
      %1983 = vmatmul.f32.gmra.mxu0 %v1869
      %v1984 = vpop.f32.mrf.mxu0
      %v1985 = vadd.f32 0.0, %v1984
      %1986 = vmatmul.f32.gmra.mxu0 %v1872
      %v1987 = vpop.f32.mrf.mxu0
      %v1988 = vadd.f32 0.0, %v1987
      %1989 = vmatmul.f32.gmra.mxu0 %v1875
      %v1990 = vpop.f32.mrf.mxu0
      %v1991 = vadd.f32 0.0, %v1990
      %1992 = vmatmul.f32.gmra.mxu0 %v1878
      %v1993 = vpop.f32.mrf.mxu0
      %v1994 = vadd.f32 0.0, %v1993
      %1995 = vmatmul.f32.gmra.mxu0 %v1881
      %v1996 = vpop.f32.mrf.mxu0
      %v1997 = vadd.f32 0.0, %v1996
      %1998 = vmatmul.f32.gmra.mxu0 %v1884
      %v1999 = vpop.f32.mrf.mxu0
      %v2000 = vadd.f32 0.0, %v1999
      %2001 = vmatmul.f32.gmra.mxu0 %v1887
      %v2002 = vpop.f32.mrf.mxu0
      %v2003 = vadd.f32 0.0, %v2002
      %2004 = vmatmul.f32.gmra.mxu0 %v1890
      %v2005 = vpop.f32.mrf.mxu0
      %v2006 = vadd.f32 0.0, %v2005
      %2007 = vmatmul.f32.gmra.mxu0 %v1893
      %v2008 = vpop.f32.mrf.mxu0
      %v2009 = vadd.f32 0.0, %v2008
      %2010 = vmatmul.f32.gmra.mxu0 %v1896
      %v2011 = vpop.f32.mrf.mxu0
      %v2012 = vadd.f32 0.0, %v2011
      %2013 = vmatmul.f32.gmra.mxu0 %v1899
      %v2014 = vpop.f32.mrf.mxu0
      %v2015 = vadd.f32 0.0, %v2014
      %2016 = vmatmul.f32.gmra.mxu0 %v1902
      %v2017 = vpop.f32.mrf.mxu0
      %v2018 = vadd.f32 0.0, %v2017
      %2019 = vmatmul.f32.gmra.mxu0 %v1905
      %v2020 = vpop.f32.mrf.mxu0
      %v2021 = vadd.f32 0.0, %v2020
      %2022 = vmatmul.f32.gmra.mxu0 %v1908
      %v2023 = vpop.f32.mrf.mxu0
      %v2024 = vadd.f32 0.0, %v2023
      %2025 = vmatmul.f32.gmra.mxu0 %v1911
      %v2026 = vpop.f32.mrf.mxu0
      %v2027 = vadd.f32 0.0, %v2026
      %2028 = vmatmul.f32.gmra.mxu0 %v1914
      %v2029 = vpop.f32.mrf.mxu0
      %v2030 = vadd.f32 0.0, %v2029
      %2031 = vmatmul.f32.gmra.mxu0 %v1917
      %v2032 = vpop.f32.mrf.mxu0
      %v2033 = vadd.f32 0.0, %v2032
      %2034 = vmatmul.f32.gmra.mxu0 %v1920
      %v2035 = vpop.f32.mrf.mxu0
      %v2036 = vadd.f32 0.0, %v2035
      %2037 = vmatmul.f32.gmra.mxu0 %v1923
      %v2038 = vpop.f32.mrf.mxu0
      %v2039 = vadd.f32 0.0, %v2038
      %2040 = vmatmul.f32.gmra.mxu0 %v1926
      %v2041 = vpop.f32.mrf.mxu0
      %v2042 = vadd.f32 0.0, %v2041
      %2043 = vmatmul.f32.gmra.mxu0 %v1929
      %v2044 = vpop.f32.mrf.mxu0
      %v2045 = vadd.f32 0.0, %v2044
      %2046 = vmatmul.f32.gmra.mxu0 %v1932
      %v2047 = vpop.f32.mrf.mxu0
      %v2048 = vadd.f32 0.0, %v2047
      %2049 = vmatmul.f32.gmra.mxu0 %v1935
      %v2050 = vpop.f32.mrf.mxu0
      %v2051 = vadd.f32 0.0, %v2050
      %2052 = vmatmul.f32.gmra.mxu0 %v1938
      %v2053 = vpop.f32.mrf.mxu0
      %v2054 = vadd.f32 0.0, %v2053
      %2055 = vmatmul.f32.gmra.mxu0 %v1941
      %v2056 = vpop.f32.mrf.mxu0
      %v2057 = vadd.f32 0.0, %v2056
      %2058 = vmatmul.f32.gmra.mxu0 %v1944
      %v2059 = vpop.f32.mrf.mxu0
      %v2060 = vadd.f32 0.0, %v2059
      %2061 = vmatmul.f32.gmra.mxu0 %v1947
      %v2062 = vpop.f32.mrf.mxu0
      %v2063 = vadd.f32 0.0, %v2062
      %2064 = vmatmul.f32.gmra.mxu0 %v1950
      %v2065 = vpop.f32.mrf.mxu0
      %v2066 = vadd.f32 0.0, %v2065
      %2067 = vmatmul.f32.gmra.mxu0 %v1953
      %v2068 = vpop.f32.mrf.mxu0
      %v2069 = vadd.f32 0.0, %v2068
      %2070 = vmatmul.f32.gmra.mxu0 %v1956
      %v2071 = vpop.f32.mrf.mxu0
      %v2072 = vadd.f32 0.0, %v2071
      %2073 = vdwg.mxu0
      %v2074 = vadd.f32 %v1795, %v1979
      %v2075 = vadd.f32 %v1796, %v1982
      %v2076 = vadd.f32 %v1797, %v1985
      %v2077 = vadd.f32 %v1798, %v1988
      %v2078 = vadd.f32 %v1799, %v1991
      %v2079 = vadd.f32 %v1800, %v1994
      %v2080 = vadd.f32 %v1801, %v1997
      %v2081 = vadd.f32 %v1802, %v2000
      %v2082 = vadd.f32 %v1803, %v2003
      %v2083 = vadd.f32 %v1804, %v2006
      %v2084 = vadd.f32 %v1805, %v2009
      %v2085 = vadd.f32 %v1806, %v2012
      %v2086 = vadd.f32 %v1807, %v2015
      %v2087 = vadd.f32 %v1808, %v2018
      %v2088 = vadd.f32 %v1809, %v2021
      %v2089 = vadd.f32 %v1810, %v2024
      %v2090 = vadd.f32 %v1811, %v2027
      %v2091 = vadd.f32 %v1812, %v2030
      %v2092 = vadd.f32 %v1813, %v2033
      %v2093 = vadd.f32 %v1814, %v2036
      %v2094 = vadd.f32 %v1815, %v2039
      %v2095 = vadd.f32 %v1816, %v2042
      %v2096 = vadd.f32 %v1817, %v2045
      %v2097 = vadd.f32 %v1818, %v2048
      %v2098 = vadd.f32 %v1819, %v2051
      %v2099 = vadd.f32 %v1820, %v2054
      %v2100 = vadd.f32 %v1821, %v2057
      %v2101 = vadd.f32 %v1822, %v2060
      %v2102 = vadd.f32 %v1823, %v2063
      %v2103 = vadd.f32 %v1824, %v2066
      %v2104 = vadd.f32 %v1825, %v2069
      %v2105 = vadd.f32 %v1826, %v2072
      %v2106 = vld [vmem:[%s1827 + $0x1] sm:$0xff]
      %v2107 = vld [vmem:[%s1827 + $0x9] sm:$0xff]
      %v2108 = vld [vmem:[%s1827 + $0x19] sm:$0xff]
      %v2109 = vld [vmem:[%s1827 + $0x21] sm:$0xff]
      %v2110 = vld [vmem:[%s1827 + $0x31] sm:$0xff]
      %v2111 = vld [vmem:[%s1827 + $0x39] sm:$0xff]
      %v2112 = vld [vmem:[%s1827 + $0x49] sm:$0xff]
      %v2113 = vld [vmem:[%s1827 + $0x51] sm:$0xff]
      %v2114 = vld [vmem:[%s1827 + $0x61] sm:$0xff]
      %v2115 = vld [vmem:[%s1827 + $0x69] sm:$0xff]
      %v2116 = vld [vmem:[%s1827 + $0x79] sm:$0xff]
      %v2117 = vld [vmem:[%s1827 + $0x81] sm:$0xff]
      %v2118 = vld [vmem:[%s1827 + $0x91] sm:$0xff]
      %v2119 = vld [vmem:[%s1827 + $0x99] sm:$0xff]
      %v2120 = vld [vmem:[%s1827 + $0xa9] sm:$0xff]
      %v2121 = vld [vmem:[%s1827 + $0xb1] sm:$0xff]
      %v2122 = vld [vmem:[%s1827 + $0xc1] sm:$0xff]
      %v2123 = vld [vmem:[%s1827 + $0xc9] sm:$0xff]
      %v2124 = vld [vmem:[%s1827 + $0xd9] sm:$0xff]
      %v2125 = vld [vmem:[%s1827 + $0xe1] sm:$0xff]
      %v2126 = vld [vmem:[%s1827 + $0xf1] sm:$0xff]
      %v2127 = vld [vmem:[%s1827 + $0xf9] sm:$0xff]
      %v2128 = vld [vmem:[%s1827 + $0x109] sm:$0xff]
      %v2129 = vld [vmem:[%s1827 + $0x111] sm:$0xff]
      %v2130 = vld [vmem:[%s1827 + $0x121] sm:$0xff]
      %v2131 = vld [vmem:[%s1827 + $0x129] sm:$0xff]
      %v2132 = vld [vmem:[%s1827 + $0x139] sm:$0xff]
      %v2133 = vld [vmem:[%s1827 + $0x141] sm:$0xff]
      %v2134 = vld [vmem:[%s1827 + $0x151] sm:$0xff]
      %v2135 = vld [vmem:[%s1827 + $0x159] sm:$0xff]
      %v2136 = vld [vmem:[%s1827 + $0x169] sm:$0xff]
      %v2137 = vld [vmem:[%s1827 + $0x171] sm:$0xff]
      %s2138 = scalar_lea.vmem %s1, 28
      %v2139 = vld [vmem:[%s2138] sm:$0xf]
      %v2141 = vsel %vm288, %v2106, 0
      %v2144 = vsel %vm288, %v2107, 0
      %v2147 = vsel %vm288, %v2108, 0
      %v2150 = vsel %vm288, %v2109, 0
      %v2153 = vsel %vm288, %v2110, 0
      %v2156 = vsel %vm288, %v2111, 0
      %v2159 = vsel %vm288, %v2112, 0
      %v2162 = vsel %vm288, %v2113, 0
      %v2165 = vsel %vm288, %v2114, 0
      %v2168 = vsel %vm288, %v2115, 0
      %v2171 = vsel %vm288, %v2116, 0
      %v2174 = vsel %vm288, %v2117, 0
      %v2177 = vsel %vm288, %v2118, 0
      %v2180 = vsel %vm288, %v2119, 0
      %v2183 = vsel %vm288, %v2120, 0
      %v2186 = vsel %vm288, %v2121, 0
      %v2189 = vsel %vm288, %v2122, 0
      %v2192 = vsel %vm288, %v2123, 0
      %v2195 = vsel %vm288, %v2124, 0
      %v2198 = vsel %vm288, %v2125, 0
      %v2201 = vsel %vm288, %v2126, 0
      %v2204 = vsel %vm288, %v2127, 0
      %v2207 = vsel %vm288, %v2128, 0
      %v2210 = vsel %vm288, %v2129, 0
      %v2213 = vsel %vm288, %v2130, 0
      %v2216 = vsel %vm288, %v2131, 0
      %v2219 = vsel %vm288, %v2132, 0
      %v2222 = vsel %vm288, %v2133, 0
      %v2225 = vsel %vm288, %v2134, 0
      %v2228 = vsel %vm288, %v2135, 0
      %v2231 = vsel %vm288, %v2136, 0
      %v2234 = vsel %vm288, %v2137, 0
      %v2237 = vsel %vm385, %v2139, 0
      %2239 = vmatpush.msra.mxu0 0.0
      %2240 = vmatpush.msra.mxu0 0.0
      %2241 = vmatpush.msra.mxu0 0.0
      %2242 = vmatpush.msra.mxu0 0.0
      %2243 = vmatpush.msra.mxu0 0.0
      %2244 = vmatpush.msra.mxu0 0.0
      %2245 = vmatpush.msra.mxu0 0.0
      %2246 = vmatpush.msra.mxu0 0.0
      %2247 = vmatpush.msra.mxu0 0.0
      %2248 = vmatpush.msra.mxu0 0.0
      %2249 = vmatpush.msra.mxu0 0.0
      %2250 = vmatpush.msra.mxu0 0.0
      %2251 = vmatpush.msra.mxu0 0.0
      %2252 = vmatpush.msra.mxu0 0.0
      %2253 = vmatpush.msra.mxu0 0.0
      %2254 = vmatpush.msra.mxu0 %v2237
      %2255 = vmatmul.f32.gmra.mxu0 %v2141
      %v2256 = vpop.f32.mrf.mxu0
      %v2257 = vadd.f32 0.0, %v2256
      %2258 = vmatmul.f32.gmra.mxu0 %v2144
      %v2259 = vpop.f32.mrf.mxu0
      %v2260 = vadd.f32 0.0, %v2259
      %2261 = vmatmul.f32.gmra.mxu0 %v2147
      %v2262 = vpop.f32.mrf.mxu0
      %v2263 = vadd.f32 0.0, %v2262
      %2264 = vmatmul.f32.gmra.mxu0 %v2150
      %v2265 = vpop.f32.mrf.mxu0
      %v2266 = vadd.f32 0.0, %v2265
      %2267 = vmatmul.f32.gmra.mxu0 %v2153
      %v2268 = vpop.f32.mrf.mxu0
      %v2269 = vadd.f32 0.0, %v2268
      %2270 = vmatmul.f32.gmra.mxu0 %v2156
      %v2271 = vpop.f32.mrf.mxu0
      %v2272 = vadd.f32 0.0, %v2271
      %2273 = vmatmul.f32.gmra.mxu0 %v2159
      %v2274 = vpop.f32.mrf.mxu0
      %v2275 = vadd.f32 0.0, %v2274
      %2276 = vmatmul.f32.gmra.mxu0 %v2162
      %v2277 = vpop.f32.mrf.mxu0
      %v2278 = vadd.f32 0.0, %v2277
      %2279 = vmatmul.f32.gmra.mxu0 %v2165
      %v2280 = vpop.f32.mrf.mxu0
      %v2281 = vadd.f32 0.0, %v2280
      %2282 = vmatmul.f32.gmra.mxu0 %v2168
      %v2283 = vpop.f32.mrf.mxu0
      %v2284 = vadd.f32 0.0, %v2283
      %2285 = vmatmul.f32.gmra.mxu0 %v2171
      %v2286 = vpop.f32.mrf.mxu0
      %v2287 = vadd.f32 0.0, %v2286
      %2288 = vmatmul.f32.gmra.mxu0 %v2174
      %v2289 = vpop.f32.mrf.mxu0
      %v2290 = vadd.f32 0.0, %v2289
      %2291 = vmatmul.f32.gmra.mxu0 %v2177
      %v2292 = vpop.f32.mrf.mxu0
      %v2293 = vadd.f32 0.0, %v2292
      %2294 = vmatmul.f32.gmra.mxu0 %v2180
      %v2295 = vpop.f32.mrf.mxu0
      %v2296 = vadd.f32 0.0, %v2295
      %2297 = vmatmul.f32.gmra.mxu0 %v2183
      %v2298 = vpop.f32.mrf.mxu0
      %v2299 = vadd.f32 0.0, %v2298
      %2300 = vmatmul.f32.gmra.mxu0 %v2186
      %v2301 = vpop.f32.mrf.mxu0
      %v2302 = vadd.f32 0.0, %v2301
      %2303 = vmatmul.f32.gmra.mxu0 %v2189
      %v2304 = vpop.f32.mrf.mxu0
      %v2305 = vadd.f32 0.0, %v2304
      %2306 = vmatmul.f32.gmra.mxu0 %v2192
      %v2307 = vpop.f32.mrf.mxu0
      %v2308 = vadd.f32 0.0, %v2307
      %2309 = vmatmul.f32.gmra.mxu0 %v2195
      %v2310 = vpop.f32.mrf.mxu0
      %v2311 = vadd.f32 0.0, %v2310
      %2312 = vmatmul.f32.gmra.mxu0 %v2198
      %v2313 = vpop.f32.mrf.mxu0
      %v2314 = vadd.f32 0.0, %v2313
      %2315 = vmatmul.f32.gmra.mxu0 %v2201
      %v2316 = vpop.f32.mrf.mxu0
      %v2317 = vadd.f32 0.0, %v2316
      %2318 = vmatmul.f32.gmra.mxu0 %v2204
      %v2319 = vpop.f32.mrf.mxu0
      %v2320 = vadd.f32 0.0, %v2319
      %2321 = vmatmul.f32.gmra.mxu0 %v2207
      %v2322 = vpop.f32.mrf.mxu0
      %v2323 = vadd.f32 0.0, %v2322
      %2324 = vmatmul.f32.gmra.mxu0 %v2210
      %v2325 = vpop.f32.mrf.mxu0
      %v2326 = vadd.f32 0.0, %v2325
      %2327 = vmatmul.f32.gmra.mxu0 %v2213
      %v2328 = vpop.f32.mrf.mxu0
      %v2329 = vadd.f32 0.0, %v2328
      %2330 = vmatmul.f32.gmra.mxu0 %v2216
      %v2331 = vpop.f32.mrf.mxu0
      %v2332 = vadd.f32 0.0, %v2331
      %2333 = vmatmul.f32.gmra.mxu0 %v2219
      %v2334 = vpop.f32.mrf.mxu0
      %v2335 = vadd.f32 0.0, %v2334
      %2336 = vmatmul.f32.gmra.mxu0 %v2222
      %v2337 = vpop.f32.mrf.mxu0
      %v2338 = vadd.f32 0.0, %v2337
      %2339 = vmatmul.f32.gmra.mxu0 %v2225
      %v2340 = vpop.f32.mrf.mxu0
      %v2341 = vadd.f32 0.0, %v2340
      %2342 = vmatmul.f32.gmra.mxu0 %v2228
      %v2343 = vpop.f32.mrf.mxu0
      %v2344 = vadd.f32 0.0, %v2343
      %2345 = vmatmul.f32.gmra.mxu0 %v2231
      %v2346 = vpop.f32.mrf.mxu0
      %v2347 = vadd.f32 0.0, %v2346
      %2348 = vmatmul.f32.gmra.mxu0 %v2234
      %v2349 = vpop.f32.mrf.mxu0
      %v2350 = vadd.f32 0.0, %v2349
      %2351 = vdwg.mxu0
      %v2352 = vadd.f32 %v2074, %v2257
      %v2353 = vadd.f32 %v2075, %v2260
      %v2354 = vadd.f32 %v2076, %v2263
      %v2355 = vadd.f32 %v2077, %v2266
      %v2356 = vadd.f32 %v2078, %v2269
      %v2357 = vadd.f32 %v2079, %v2272
      %v2358 = vadd.f32 %v2080, %v2275
      %v2359 = vadd.f32 %v2081, %v2278
      %v2360 = vadd.f32 %v2082, %v2281
      %v2361 = vadd.f32 %v2083, %v2284
      %v2362 = vadd.f32 %v2084, %v2287
      %v2363 = vadd.f32 %v2085, %v2290
      %v2364 = vadd.f32 %v2086, %v2293
      %v2365 = vadd.f32 %v2087, %v2296
      %v2366 = vadd.f32 %v2088, %v2299
      %v2367 = vadd.f32 %v2089, %v2302
      %v2368 = vadd.f32 %v2090, %v2305
      %v2369 = vadd.f32 %v2091, %v2308
      %v2370 = vadd.f32 %v2092, %v2311
      %v2371 = vadd.f32 %v2093, %v2314
      %v2372 = vadd.f32 %v2094, %v2317
      %v2373 = vadd.f32 %v2095, %v2320
      %v2374 = vadd.f32 %v2096, %v2323
      %v2375 = vadd.f32 %v2097, %v2326
      %v2376 = vadd.f32 %v2098, %v2329
      %v2377 = vadd.f32 %v2099, %v2332
      %v2378 = vadd.f32 %v2100, %v2335
      %v2379 = vadd.f32 %v2101, %v2338
      %v2380 = vadd.f32 %v2102, %v2341
      %v2381 = vadd.f32 %v2103, %v2344
      %v2382 = vadd.f32 %v2104, %v2347
      %v2383 = vadd.f32 %v2105, %v2350
      %v2384 = vld [vmem:[%s1827 + $0x2] sm:$0xff]
      %v2385 = vld [vmem:[%s1827 + $0xa] sm:$0xff]
      %v2386 = vld [vmem:[%s1827 + $0x1a] sm:$0xff]
      %v2387 = vld [vmem:[%s1827 + $0x22] sm:$0xff]
      %v2388 = vld [vmem:[%s1827 + $0x32] sm:$0xff]
      %v2389 = vld [vmem:[%s1827 + $0x3a] sm:$0xff]
      %v2390 = vld [vmem:[%s1827 + $0x4a] sm:$0xff]
      %v2391 = vld [vmem:[%s1827 + $0x52] sm:$0xff]
      %v2392 = vld [vmem:[%s1827 + $0x62] sm:$0xff]
      %v2393 = vld [vmem:[%s1827 + $0x6a] sm:$0xff]
      %v2394 = vld [vmem:[%s1827 + $0x7a] sm:$0xff]
      %v2395 = vld [vmem:[%s1827 + $0x82] sm:$0xff]
      %v2396 = vld [vmem:[%s1827 + $0x92] sm:$0xff]
      %v2397 = vld [vmem:[%s1827 + $0x9a] sm:$0xff]
      %v2398 = vld [vmem:[%s1827 + $0xaa] sm:$0xff]
      %v2399 = vld [vmem:[%s1827 + $0xb2] sm:$0xff]
      %v2400 = vld [vmem:[%s1827 + $0xc2] sm:$0xff]
      %v2401 = vld [vmem:[%s1827 + $0xca] sm:$0xff]
      %v2402 = vld [vmem:[%s1827 + $0xda] sm:$0xff]
      %v2403 = vld [vmem:[%s1827 + $0xe2] sm:$0xff]
      %v2404 = vld [vmem:[%s1827 + $0xf2] sm:$0xff]
      %v2405 = vld [vmem:[%s1827 + $0xfa] sm:$0xff]
      %v2406 = vld [vmem:[%s1827 + $0x10a] sm:$0xff]
      %v2407 = vld [vmem:[%s1827 + $0x112] sm:$0xff]
      %v2408 = vld [vmem:[%s1827 + $0x122] sm:$0xff]
      %v2409 = vld [vmem:[%s1827 + $0x12a] sm:$0xff]
      %v2410 = vld [vmem:[%s1827 + $0x13a] sm:$0xff]
      %v2411 = vld [vmem:[%s1827 + $0x142] sm:$0xff]
      %v2412 = vld [vmem:[%s1827 + $0x152] sm:$0xff]
      %v2413 = vld [vmem:[%s1827 + $0x15a] sm:$0xff]
      %v2414 = vld [vmem:[%s1827 + $0x16a] sm:$0xff]
      %v2415 = vld [vmem:[%s1827 + $0x172] sm:$0xff]
      %s2416 = scalar_lea.vmem %s1, 32
      %v2417 = vld [vmem:[%s2416] sm:$0xf]
      %v2419 = vsel %vm288, %v2384, 0
      %v2422 = vsel %vm288, %v2385, 0
      %v2425 = vsel %vm288, %v2386, 0
      %v2428 = vsel %vm288, %v2387, 0
      %v2431 = vsel %vm288, %v2388, 0
      %v2434 = vsel %vm288, %v2389, 0
      %v2437 = vsel %vm288, %v2390, 0
      %v2440 = vsel %vm288, %v2391, 0
      %v2443 = vsel %vm288, %v2392, 0
      %v2446 = vsel %vm288, %v2393, 0
      %v2449 = vsel %vm288, %v2394, 0
      %v2452 = vsel %vm288, %v2395, 0
      %v2455 = vsel %vm288, %v2396, 0
      %v2458 = vsel %vm288, %v2397, 0
      %v2461 = vsel %vm288, %v2398, 0
      %v2464 = vsel %vm288, %v2399, 0
      %v2467 = vsel %vm288, %v2400, 0
      %v2470 = vsel %vm288, %v2401, 0
      %v2473 = vsel %vm288, %v2402, 0
      %v2476 = vsel %vm288, %v2403, 0
      %v2479 = vsel %vm288, %v2404, 0
      %v2482 = vsel %vm288, %v2405, 0
      %v2485 = vsel %vm288, %v2406, 0
      %v2488 = vsel %vm288, %v2407, 0
      %v2491 = vsel %vm288, %v2408, 0
      %v2494 = vsel %vm288, %v2409, 0
      %v2497 = vsel %vm288, %v2410, 0
      %v2500 = vsel %vm288, %v2411, 0
      %v2503 = vsel %vm288, %v2412, 0
      %v2506 = vsel %vm288, %v2413, 0
      %v2509 = vsel %vm288, %v2414, 0
      %v2512 = vsel %vm288, %v2415, 0
      %v2515 = vsel %vm385, %v2417, 0
      %2517 = vmatpush.msra.mxu0 0.0
      %2518 = vmatpush.msra.mxu0 0.0
      %2519 = vmatpush.msra.mxu0 0.0
      %2520 = vmatpush.msra.mxu0 0.0
      %2521 = vmatpush.msra.mxu0 0.0
      %2522 = vmatpush.msra.mxu0 0.0
      %2523 = vmatpush.msra.mxu0 0.0
      %2524 = vmatpush.msra.mxu0 0.0
      %2525 = vmatpush.msra.mxu0 0.0
      %2526 = vmatpush.msra.mxu0 0.0
      %2527 = vmatpush.msra.mxu0 0.0
      %2528 = vmatpush.msra.mxu0 0.0
      %2529 = vmatpush.msra.mxu0 0.0
      %2530 = vmatpush.msra.mxu0 0.0
      %2531 = vmatpush.msra.mxu0 0.0
      %2532 = vmatpush.msra.mxu0 %v2515
      %2533 = vmatmul.f32.gmra.mxu0 %v2419
      %v2534 = vpop.f32.mrf.mxu0
      %v2535 = vadd.f32 0.0, %v2534
      %2536 = vmatmul.f32.gmra.mxu0 %v2422
      %v2537 = vpop.f32.mrf.mxu0
      %v2538 = vadd.f32 0.0, %v2537
      %2539 = vmatmul.f32.gmra.mxu0 %v2425
      %v2540 = vpop.f32.mrf.mxu0
      %v2541 = vadd.f32 0.0, %v2540
      %2542 = vmatmul.f32.gmra.mxu0 %v2428
      %v2543 = vpop.f32.mrf.mxu0
      %v2544 = vadd.f32 0.0, %v2543
      %2545 = vmatmul.f32.gmra.mxu0 %v2431
      %v2546 = vpop.f32.mrf.mxu0
      %v2547 = vadd.f32 0.0, %v2546
      %2548 = vmatmul.f32.gmra.mxu0 %v2434
      %v2549 = vpop.f32.mrf.mxu0
      %v2550 = vadd.f32 0.0, %v2549
      %2551 = vmatmul.f32.gmra.mxu0 %v2437
      %v2552 = vpop.f32.mrf.mxu0
      %v2553 = vadd.f32 0.0, %v2552
      %2554 = vmatmul.f32.gmra.mxu0 %v2440
      %v2555 = vpop.f32.mrf.mxu0
      %v2556 = vadd.f32 0.0, %v2555
      %2557 = vmatmul.f32.gmra.mxu0 %v2443
      %v2558 = vpop.f32.mrf.mxu0
      %v2559 = vadd.f32 0.0, %v2558
      %2560 = vmatmul.f32.gmra.mxu0 %v2446
      %v2561 = vpop.f32.mrf.mxu0
      %v2562 = vadd.f32 0.0, %v2561
      %2563 = vmatmul.f32.gmra.mxu0 %v2449
      %v2564 = vpop.f32.mrf.mxu0
      %v2565 = vadd.f32 0.0, %v2564
      %2566 = vmatmul.f32.gmra.mxu0 %v2452
      %v2567 = vpop.f32.mrf.mxu0
      %v2568 = vadd.f32 0.0, %v2567
      %2569 = vmatmul.f32.gmra.mxu0 %v2455
      %v2570 = vpop.f32.mrf.mxu0
      %v2571 = vadd.f32 0.0, %v2570
      %2572 = vmatmul.f32.gmra.mxu0 %v2458
      %v2573 = vpop.f32.mrf.mxu0
      %v2574 = vadd.f32 0.0, %v2573
      %2575 = vmatmul.f32.gmra.mxu0 %v2461
      %v2576 = vpop.f32.mrf.mxu0
      %v2577 = vadd.f32 0.0, %v2576
      %2578 = vmatmul.f32.gmra.mxu0 %v2464
      %v2579 = vpop.f32.mrf.mxu0
      %v2580 = vadd.f32 0.0, %v2579
      %2581 = vmatmul.f32.gmra.mxu0 %v2467
      %v2582 = vpop.f32.mrf.mxu0
      %v2583 = vadd.f32 0.0, %v2582
      %2584 = vmatmul.f32.gmra.mxu0 %v2470
      %v2585 = vpop.f32.mrf.mxu0
      %v2586 = vadd.f32 0.0, %v2585
      %2587 = vmatmul.f32.gmra.mxu0 %v2473
      %v2588 = vpop.f32.mrf.mxu0
      %v2589 = vadd.f32 0.0, %v2588
      %2590 = vmatmul.f32.gmra.mxu0 %v2476
      %v2591 = vpop.f32.mrf.mxu0
      %v2592 = vadd.f32 0.0, %v2591
      %2593 = vmatmul.f32.gmra.mxu0 %v2479
      %v2594 = vpop.f32.mrf.mxu0
      %v2595 = vadd.f32 0.0, %v2594
      %2596 = vmatmul.f32.gmra.mxu0 %v2482
      %v2597 = vpop.f32.mrf.mxu0
      %v2598 = vadd.f32 0.0, %v2597
      %2599 = vmatmul.f32.gmra.mxu0 %v2485
      %v2600 = vpop.f32.mrf.mxu0
      %v2601 = vadd.f32 0.0, %v2600
      %2602 = vmatmul.f32.gmra.mxu0 %v2488
      %v2603 = vpop.f32.mrf.mxu0
      %v2604 = vadd.f32 0.0, %v2603
      %2605 = vmatmul.f32.gmra.mxu0 %v2491
      %v2606 = vpop.f32.mrf.mxu0
      %v2607 = vadd.f32 0.0, %v2606
      %2608 = vmatmul.f32.gmra.mxu0 %v2494
      %v2609 = vpop.f32.mrf.mxu0
      %v2610 = vadd.f32 0.0, %v2609
      %2611 = vmatmul.f32.gmra.mxu0 %v2497
      %v2612 = vpop.f32.mrf.mxu0
      %v2613 = vadd.f32 0.0, %v2612
      %2614 = vmatmul.f32.gmra.mxu0 %v2500
      %v2615 = vpop.f32.mrf.mxu0
      %v2616 = vadd.f32 0.0, %v2615
      %2617 = vmatmul.f32.gmra.mxu0 %v2503
      %v2618 = vpop.f32.mrf.mxu0
      %v2619 = vadd.f32 0.0, %v2618
      %2620 = vmatmul.f32.gmra.mxu0 %v2506
      %v2621 = vpop.f32.mrf.mxu0
      %v2622 = vadd.f32 0.0, %v2621
      %2623 = vmatmul.f32.gmra.mxu0 %v2509
      %v2624 = vpop.f32.mrf.mxu0
      %v2625 = vadd.f32 0.0, %v2624
      %2626 = vmatmul.f32.gmra.mxu0 %v2512
      %v2627 = vpop.f32.mrf.mxu0
      %v2628 = vadd.f32 0.0, %v2627
      %2629 = vdwg.mxu0
      %v2630 = vadd.f32 %v2352, %v2535
      %v2631 = vadd.f32 %v2353, %v2538
      %v2632 = vadd.f32 %v2354, %v2541
      %v2633 = vadd.f32 %v2355, %v2544
      %v2634 = vadd.f32 %v2356, %v2547
      %v2635 = vadd.f32 %v2357, %v2550
      %v2636 = vadd.f32 %v2358, %v2553
      %v2637 = vadd.f32 %v2359, %v2556
      %v2638 = vadd.f32 %v2360, %v2559
      %v2639 = vadd.f32 %v2361, %v2562
      %v2640 = vadd.f32 %v2362, %v2565
      %v2641 = vadd.f32 %v2363, %v2568
      %v2642 = vadd.f32 %v2364, %v2571
      %v2643 = vadd.f32 %v2365, %v2574
      %v2644 = vadd.f32 %v2366, %v2577
      %v2645 = vadd.f32 %v2367, %v2580
      %v2646 = vadd.f32 %v2368, %v2583
      %v2647 = vadd.f32 %v2369, %v2586
      %v2648 = vadd.f32 %v2370, %v2589
      %v2649 = vadd.f32 %v2371, %v2592
      %v2650 = vadd.f32 %v2372, %v2595
      %v2651 = vadd.f32 %v2373, %v2598
      %v2652 = vadd.f32 %v2374, %v2601
      %v2653 = vadd.f32 %v2375, %v2604
      %v2654 = vadd.f32 %v2376, %v2607
      %v2655 = vadd.f32 %v2377, %v2610
      %v2656 = vadd.f32 %v2378, %v2613
      %v2657 = vadd.f32 %v2379, %v2616
      %v2658 = vadd.f32 %v2380, %v2619
      %v2659 = vadd.f32 %v2381, %v2622
      %v2660 = vadd.f32 %v2382, %v2625
      %v2661 = vadd.f32 %v2383, %v2628
      %v2662 = vld [vmem:[%s2] sm:$0x1]
      %v2664 = vperm.slane %v2662, 0
      %v2666 = vadd.f32 %v2630, %v2664
      %v2667 = vadd.f32 %v2631, %v2664
      %v2668 = vadd.f32 %v2632, %v2664
      %v2669 = vadd.f32 %v2633, %v2664
      %v2670 = vadd.f32 %v2634, %v2664
      %v2671 = vadd.f32 %v2635, %v2664
      %v2672 = vadd.f32 %v2636, %v2664
      %v2673 = vadd.f32 %v2637, %v2664
      %v2674 = vadd.f32 %v2638, %v2664
      %v2675 = vadd.f32 %v2639, %v2664
      %v2676 = vadd.f32 %v2640, %v2664
      %v2677 = vadd.f32 %v2641, %v2664
      %v2678 = vadd.f32 %v2642, %v2664
      %v2679 = vadd.f32 %v2643, %v2664
      %v2680 = vadd.f32 %v2644, %v2664
      %v2681 = vadd.f32 %v2645, %v2664
      %v2682 = vadd.f32 %v2646, %v2664
      %v2683 = vadd.f32 %v2647, %v2664
      %v2684 = vadd.f32 %v2648, %v2664
      %v2685 = vadd.f32 %v2649, %v2664
      %v2686 = vadd.f32 %v2650, %v2664
      %v2687 = vadd.f32 %v2651, %v2664
      %v2688 = vadd.f32 %v2652, %v2664
      %v2689 = vadd.f32 %v2653, %v2664
      %v2690 = vadd.f32 %v2654, %v2664
      %v2691 = vadd.f32 %v2655, %v2664
      %v2692 = vadd.f32 %v2656, %v2664
      %v2693 = vadd.f32 %v2657, %v2664
      %v2694 = vadd.f32 %v2658, %v2664
      %v2695 = vadd.f32 %v2659, %v2664
      %v2696 = vadd.f32 %v2660, %v2664
      %v2697 = vadd.f32 %v2661, %v2664
      %v2698 = vmax.f32 %v2666, 0.0
      %v2699 = vmax.f32 %v2667, 0.0
      %v2700 = vmax.f32 %v2668, 0.0
      %v2701 = vmax.f32 %v2669, 0.0
      %v2702 = vmax.f32 %v2670, 0.0
      %v2703 = vmax.f32 %v2671, 0.0
      %v2704 = vmax.f32 %v2672, 0.0
      %v2705 = vmax.f32 %v2673, 0.0
      %v2706 = vmax.f32 %v2674, 0.0
      %v2707 = vmax.f32 %v2675, 0.0
      %v2708 = vmax.f32 %v2676, 0.0
      %v2709 = vmax.f32 %v2677, 0.0
      %v2710 = vmax.f32 %v2678, 0.0
      %v2711 = vmax.f32 %v2679, 0.0
      %v2712 = vmax.f32 %v2680, 0.0
      %v2713 = vmax.f32 %v2681, 0.0
      %v2714 = vmax.f32 %v2682, 0.0
      %v2715 = vmax.f32 %v2683, 0.0
      %v2716 = vmax.f32 %v2684, 0.0
      %v2717 = vmax.f32 %v2685, 0.0
      %v2718 = vmax.f32 %v2686, 0.0
      %v2719 = vmax.f32 %v2687, 0.0
      %v2720 = vmax.f32 %v2688, 0.0
      %v2721 = vmax.f32 %v2689, 0.0
      %v2722 = vmax.f32 %v2690, 0.0
      %v2723 = vmax.f32 %v2691, 0.0
      %v2724 = vmax.f32 %v2692, 0.0
      %v2725 = vmax.f32 %v2693, 0.0
      %v2726 = vmax.f32 %v2694, 0.0
      %v2727 = vmax.f32 %v2695, 0.0
      %v2728 = vmax.f32 %v2696, 0.0
      %v2729 = vmax.f32 %v2697, 0.0
      %vm2730 = vcmask 261120
      %v2731 = vsel %vm2730, %v2698, 0.0
      %v2732 = vsel %vm2730, %v2699, 0.0
      %v2733 = vadd.f32 %v2731, %v2732
      %v2734 = vsel %vm2730, %v2700, 0.0
      %v2735 = vadd.f32 %v2733, %v2734
      %v2736 = vsel %vm2730, %v2701, 0.0
      %v2737 = vadd.f32 %v2735, %v2736
      %v2738 = vsel %vm2730, %v2702, 0.0
      %v2739 = vadd.f32 %v2737, %v2738
      %v2740 = vsel %vm2730, %v2703, 0.0
      %v2741 = vadd.f32 %v2739, %v2740
      %v2742 = vsel %vm2730, %v2704, 0.0
      %v2743 = vadd.f32 %v2741, %v2742
      %v2744 = vsel %vm2730, %v2705, 0.0
      %v2745 = vadd.f32 %v2743, %v2744
      %v2746 = vsel %vm2730, %v2706, 0.0
      %v2747 = vadd.f32 %v2745, %v2746
      %v2748 = vsel %vm2730, %v2707, 0.0
      %v2749 = vadd.f32 %v2747, %v2748
      %v2750 = vsel %vm2730, %v2708, 0.0
      %v2751 = vadd.f32 %v2749, %v2750
      %v2752 = vsel %vm2730, %v2709, 0.0
      %v2753 = vadd.f32 %v2751, %v2752
      %v2754 = vsel %vm2730, %v2710, 0.0
      %v2755 = vadd.f32 %v2753, %v2754
      %v2756 = vsel %vm2730, %v2711, 0.0
      %v2757 = vadd.f32 %v2755, %v2756
      %v2758 = vsel %vm2730, %v2712, 0.0
      %v2759 = vadd.f32 %v2757, %v2758
      %v2760 = vsel %vm2730, %v2713, 0.0
      %v2761 = vadd.f32 %v2759, %v2760
      %v2762 = vsel %vm2730, %v2714, 0.0
      %v2763 = vadd.f32 %v2761, %v2762
      %v2764 = vsel %vm2730, %v2715, 0.0
      %v2765 = vadd.f32 %v2763, %v2764
      %v2766 = vsel %vm2730, %v2716, 0.0
      %v2767 = vadd.f32 %v2765, %v2766
      %v2768 = vsel %vm2730, %v2717, 0.0
      %v2769 = vadd.f32 %v2767, %v2768
      %v2770 = vsel %vm2730, %v2718, 0.0
      %v2771 = vadd.f32 %v2769, %v2770
      %v2772 = vsel %vm2730, %v2719, 0.0
      %v2773 = vadd.f32 %v2771, %v2772
      %v2774 = vsel %vm2730, %v2720, 0.0
      %v2775 = vadd.f32 %v2773, %v2774
      %v2776 = vsel %vm2730, %v2721, 0.0
      %v2777 = vadd.f32 %v2775, %v2776
      %v2778 = vsel %vm2730, %v2722, 0.0
      %v2779 = vadd.f32 %v2777, %v2778
      %v2780 = vsel %vm2730, %v2723, 0.0
      %v2781 = vadd.f32 %v2779, %v2780
      %v2782 = vsel %vm2730, %v2724, 0.0
      %v2783 = vadd.f32 %v2781, %v2782
      %v2784 = vsel %vm2730, %v2725, 0.0
      %v2785 = vadd.f32 %v2783, %v2784
      %v2786 = vsel %vm2730, %v2726, 0.0
      %v2787 = vadd.f32 %v2785, %v2786
      %v2788 = vsel %vm2730, %v2727, 0.0
      %v2789 = vadd.f32 %v2787, %v2788
      %v2790 = vsel %vm2730, %v2728, 0.0
      %v2791 = vadd.f32 %v2789, %v2790
      %v2792 = vsel %vm2730, %v2729, 0.0
      %v2793 = vadd.f32 %v2791, %v2792
      %v2794 = vrot.slane %v2793, 4
      %v2795 = vadd.f32 %v2793, %v2794
      %v2796 = vrot.slane %v2795, 2
      %v2797 = vadd.f32 %v2795, %v2796
      %v2798 = vrot.slane %v2797, 1
      %v2799 = vadd.f32 %v2797, %v2798
      %v2800 = vmul.f32 %v2799, 0.00390625
      %v2801 = vld [vmem:[%s3] sm:$0xff]
      %v2802 = vld [vmem:[%s3 + $0x8] sm:$0xff]
      %v2803 = vld [vmem:[%s3 + $0x10] sm:$0xff]
      %v2804 = vld [vmem:[%s3 + $0x18] sm:$0xff]
      %v2805 = vld [vmem:[%s4] sm:$0x1]
      %v2807 = vsel %vm2730, %v2800, 0
      %2809 = vmatpush.msra.mxu0 0.0
      %2810 = vmatpush.msra.mxu0 0.0
      %2811 = vmatpush.msra.mxu0 0.0
      %2812 = vmatpush.msra.mxu0 0.0
      %2813 = vmatpush.msra.mxu0 0.0
      %2814 = vmatpush.msra.mxu0 0.0
      %2815 = vmatpush.msra.mxu0 0.0
      %2816 = vmatpush.msra.mxu0 0.0
      %2817 = vmatpush.msra.mxu0 0.0
      %2818 = vmatpush.msra.mxu0 0.0
      %2819 = vmatpush.msra.mxu0 0.0
      %2820 = vmatpush.msra.mxu0 0.0
      %2821 = vmatpush.msra.mxu0 %v2804
      %2822 = vmatpush.msra.mxu0 %v2803
      %2823 = vmatpush.msra.mxu0 %v2802
      %2824 = vmatpush.msra.mxu0 %v2801
      %2825 = vmatmul.f32.gmra.mxu0 %v2807
      %v2826 = vpop.f32.mrf.mxu0
      %v2827 = vadd.f32 %v2805, %v2826
      %2828 = vdwg.mxu0
      %v2829 = vmul.f32 %v2827, %v2827
      %vm2830 = vcmask 516096
      %v2831 = vsel %vm2830, %v2829, 0.0
      %2832 = vadd.xlane.f32.xlu0 %v2831
      %v2833 = vpop.xlane.xlu0 %2832
      %v2834 = vadd.f32 %v2833, 1e-12
      %v2835 = vrsqrt.pop %v2834
      %v2836 = vmul.f32 %v2835, %v2834
      %v2837 = vmul.f32 %v2836, %v2835
      %v2838 = vmul.f32 0.5, %v2837
      %v2839 = vsub.f32 1.5, %v2838
      %v2840 = vmul.f32 %v2835, %v2839
      %vm2841 = vweird.f32 %v2834
      %vm2842 = vweird.f32 %v2835
      %vm2843 = vmor %vm2841, %vm2842
      %v2844 = vsel %vm2843, %v2835, %v2840
      %v2845 = vmul.f32 %v2827, %v2844
      %2846 = vst.msk [vmem:[%s220] sm:$0x1] %vm2830, %v2845
      %p2847 = scmp.lt.s32.totalorder %s16, 1
      %s2848 = scalar_select %p2847, %s16, 1
      %s2849 = scalar_lea.vmem %s5, %s2848
      // Predicated region
      $region41: #{softtriple_net_forward.2} parent=39 // pred_check
        %p2850 = pneg %p144
      $region42: #{softtriple_net_forward.2} parent=39 // pred_check_branch
        %2852 = sbr.rel (%p2850) target = $region44
      $region43: #{softtriple_net_forward.2} parent=39 // pred_region
        _
      $region44: #{softtriple_net_forward.2} parent=39 // pred_fallthru
        _
    $region40: #{softtriple_net_forward.2} parent=5 // pred_fallthru
      _
    %p2853 = scmp.le.s32.totalorder 2, %s11
    // Predicated region
    $region45: #{softtriple_net_forward.2} parent=5 // pred_check
      %p2854 = pneg %p2853
    $region46: #{softtriple_net_forward.2} parent=5 // pred_check_branch
      %2856 = sbr.rel (%p2854) target = $region48
    $region47: #{softtriple_net_forward.2} parent=5 // pred_region
      %s2857 = ssub.s32 %s11, 2
      // Predicated region
      $region49: #{softtriple_net_forward.2} parent=47 // pred_check
        %p2858 = pneg %p150
      $region50: #{softtriple_net_forward.2} parent=47 // pred_check_branch
        %2860 = sbr.rel (%p2858) target = $region52
      $region51: #{softtriple_net_forward.2} parent=47 // pred_region
        %p2861 = scmp.lt.s32.totalorder %s17, 1
        %s2862 = scalar_select %p2861, %s17, 1
        %s2863 = scalar_lea.vmem %s5, %s2862
      $region52: #{softtriple_net_forward.2} parent=47 // pred_fallthru
        _
    $region48: #{softtriple_net_forward.2} parent=5 // pred_fallthru
      _
  $region6: #{softtriple_net_forward.2} parent=0 // loop_footer
    %s15 = sadd.s32 1, %s11
  $region7: #{softtriple_net_forward.2} parent=0 // loop_footer_branch
    %10 = sbr.rel target = $region3
  $region8: #{softtriple_net_forward.2} parent=0 // loop_exit
    _

</llo_original>
